<compile_context>
chip_gen: v5e
topology: v5e:2x2
jax: 0.10.0
libtpu: 0.0.40
codegen_flags: <defaults>
</compile_context>

<pallas_src>
import functools

import jax
import jax.numpy as jnp
from jax.experimental import pallas as pl
from jax.experimental.pallas import tpu as pltpu


_MARGIN = 128  # lane-aligned halo margin inside the tap scratch buffers


def _round_up(v, mult):
    return (v + mult - 1) // mult * mult


def _pick_images_per_step(n):
    # Largest divisor of n (from 8/4/2/1) that still leaves >= 2 grid steps,
    # so v7x can shard the grid across both TensorCores.
    for b in (8, 4, 2, 1):
        if n % b == 0 and n // b >= 2:
            return b
    return 1


# ---------------------------------------------------------------------------
# Fused Pallas kernel: the whole Inception-ResNet-A block for one grid step
# ---------------------------------------------------------------------------
def _block_kernel(x_ref, mask_ref, ws_ref, bs_ref,
                  w1b_ref, b1b_ref, w2b_ref, b2b_ref,
                  w2c_ref, b2c_ref, wf_ref, bf_ref,
                  o_ref, f8_scr, f16_scr,
                  *, scale, activation, wp):
    bl = x_ref.shape[-1]          # lane width = images_per_step * l_pad (128-mult)
    mg = _MARGIN

    # Clear only the margin strips of the tap scratches (128-wide, aligned,
    # dense stores).  Done unconditionally every step: scratch persists
    # per-core and the grid is sharded on v7x, so no program_id gating.
    f8_scr[:, 0:mg] = jnp.zeros((f8_scr.shape[0], mg), jnp.float32)
    f8_scr[:, mg + bl:] = jnp.zeros(
        (f8_scr.shape[0], f8_scr.shape[1] - mg - bl), jnp.float32)
    f16_scr[:, 0:mg] = jnp.zeros((f16_scr.shape[0], mg), jnp.float32)
    f16_scr[:, mg + bl:] = jnp.zeros(
        (f16_scr.shape[0], f16_scr.shape[1] - mg - bl), jnp.float32)

    x = x_ref[...]                # (C, BL) input, padded-plane layout
    mask = mask_ref[...]          # (1, BL): 1 at true interior pixels, else 0

    # ---- fused stem: the three 1x1 convs (branch0 / branch1a / branch2a) ----
    s = jnp.dot(ws_ref[...], x, preferred_element_type=jnp.float32)
    s = jnp.maximum(s + bs_ref[...], 0.0) * mask       # (24, BL), ring zeroed

    # 3x3 / stride-1 / pad-1 tap offsets on the flattened padded plane.
    taps = [(kh - 1) * wp + (kw - 1) for kh in range(3) for kw in range(3)]

    def conv3x3(src_scr, w_ref, b_ref):
        # im2col: sublane-concatenate the 9 lane-shifted copies read from the
        # halo-framed scratch, then ONE matmul (Cout, 9*Cin) @ (9*Cin, BL).
        stack = jnp.concatenate(
            [src_scr[:, mg + d:mg + d + bl] for d in taps], axis=0)
        y = jnp.dot(w_ref[...], stack, preferred_element_type=jnp.float32)
        return jnp.maximum(y + b_ref[...], 0.0)

    # branch 1: 1x1 -> 3x3
    f8_scr[:, mg:mg + bl] = s[8:16, :]                 # dense, 128-aligned store
    x1 = conv3x3(f8_scr, w1b_ref, b1b_ref)             # (8, BL)

    # branch 2: 1x1 -> 3x3 -> 3x3  (12-channel stage zero-padded to 16 rows)
    f8_scr[:, mg:mg + bl] = s[16:24, :]
    g = conv3x3(f8_scr, w2b_ref, b2b_ref) * mask       # (16, BL), ring zeroed
    f16_scr[:, mg:mg + bl] = g
    x2 = conv3x3(f16_scr, w2c_ref, b2c_ref)            # (16, BL)

    # ---- final 1x1 conv on concat(x0,x1,x2), fused residual (+ ReLU) -------
    cat = jnp.concatenate([s[0:8, :], x1, x2], axis=0)  # (32, BL), 8/8/16 aligned
    res = jnp.dot(wf_ref[...], cat, preferred_element_type=jnp.float32)
    out = x + scale * (res + bf_ref[...])
    if activation:
        out = jnp.maximum(out, 0.0)
    o_ref[...] = out                                    # (C, BL) lane-dense store


# ---------------------------------------------------------------------------
# Wrapper: layout plumbing + single pallas_call
# ---------------------------------------------------------------------------
def inception_resnet_a_quart(x_nchw, params, scale=1.0, activation=True):
    N, C, H, W = x_nchw.shape
    hp, wp = H + 2, W + 2
    lc = hp * wp
    l_pad = _round_up(lc, 128)           # per-image lane-dense segment
    b_img = _pick_images_per_step(N)
    n_steps = N // b_img
    bl = b_img * l_pad
    l_scr = bl + 2 * _MARGIN

    # input -> (n_steps, C, BL) padded-plane, lane-dense layout
    x = x_nchw.astype(jnp.float32)
    xp = jnp.pad(x, ((0, 0), (0, 0), (1, 1), (1, 1))).reshape(N, C, lc)
    xp = jnp.pad(xp, ((0, 0), (0, 0), (0, l_pad - lc)))
    x_ext = (xp.reshape(n_steps, b_img, C, l_pad)
               .transpose(0, 2, 1, 3).reshape(n_steps, C, bl))
    # TODO(synk): the halo embedding could be DMA'd in-kernel from raw NCHW to
    # drop these host-side pad passes; kept on host for simplicity at this size.

    # interior mask, tiled over the images packed in one step
    rows = jnp.arange(lc) // wp
    cols = jnp.arange(lc) % wp
    mask1 = ((rows >= 1) & (rows <= hp - 2) &
             (cols >= 1) & (cols <= wp - 2)).astype(jnp.float32)
    mask1 = jnp.pad(mask1, (0, l_pad - lc))
    mask = jnp.tile(mask1, (b_img,)).reshape(1, bl)

    def im2col_w(w_oihw, cin_pad=None, cout_pad=None):
        o, i = w_oihw.shape[:2]
        w = w_oihw
        if cout_pad is not None and cout_pad > o:
            w = jnp.concatenate(
                [w, jnp.zeros((cout_pad - o, i, 3, 3), w.dtype)], axis=0)
            o = cout_pad
        if cin_pad is not None and cin_pad > i:
            w = jnp.concatenate(
                [w, jnp.zeros((o, cin_pad - i, 3, 3), w.dtype)], axis=1)
            i = cin_pad
        # column block k = kh*3+kw holds w[:, :, kh, kw]  (matches tap order)
        return jnp.transpose(w, (0, 2, 3, 1)).reshape(o, 9 * i)

    # fused stem weights: rows [b0 | b1a | b2a]
    w_b0, b_b0 = params["b0"]
    w_b1a, b_b1a = params["b1a"]
    w_b2a, b_b2a = params["b2a"]
    ws = jnp.concatenate([w_b0.reshape(8, C), w_b1a.reshape(8, C),
                          w_b2a.reshape(8, C)], axis=0)            # (24, C)
    bs = jnp.concatenate([b_b0, b_b1a, b_b2a]).reshape(24, 1)

    w1b, b1b = params["b1b"]
    w2b, b2b = params["b2b"]
    w2c, b2c = params["b2c"]
    w1b_i = im2col_w(w1b)                                 # (8, 72)
    b1b_v = b1b.reshape(8, 1)
    w2b_i = im2col_w(w2b, cout_pad=16)                    # (16, 72)
    b2b_v = jnp.pad(b2b, (0, 4)).reshape(16, 1)
    w2c_i = im2col_w(w2c, cin_pad=16)                     # (16, 144)
    b2c_v = b2c.reshape(16, 1)

    wf = params["conv_w"].reshape(C, 32)
    bf = params["conv_b"].reshape(C, 1)

    kernel = functools.partial(_block_kernel, scale=float(scale),
                               activation=bool(activation), wp=wp)

    def full_spec(shape):
        nd = len(shape)
        return pl.BlockSpec(shape, lambda n, nd=nd: (0,) * nd)

    out_p = pl.pallas_call(
        kernel,
        out_shape=jax.ShapeDtypeStruct((n_steps, C, bl), jnp.float32),
        grid=(n_steps,),
        in_specs=[
            pl.BlockSpec((None, C, bl), lambda n: (n, 0, 0)),
            full_spec((1, bl)),
            full_spec(ws.shape), full_spec(bs.shape),
            full_spec(w1b_i.shape), full_spec(b1b_v.shape),
            full_spec(w2b_i.shape), full_spec(b2b_v.shape),
            full_spec(w2c_i.shape), full_spec(b2c_v.shape),
            full_spec(wf.shape), full_spec(bf.shape),
        ],
        out_specs=pl.BlockSpec((None, C, bl), lambda n: (n, 0, 0)),
        scratch_shapes=[pltpu.VMEM((8, l_scr), jnp.float32),
                        pltpu.VMEM((16, l_scr), jnp.float32)],
        compiler_params=pltpu.CompilerParams(
            dimension_semantics=("parallel",)),
    )(x_ext, mask, ws, bs, w1b_i, b1b_v, w2b_i, b2b_v, w2c_i, b2c_v, wf, bf)

    # unpack: (n_steps, C, BL) -> (N, C, H, W) interior
    out = (out_p.reshape(n_steps, C, b_img, l_pad)
                 .transpose(0, 2, 1, 3).reshape(N, C, l_pad))
    out = out[:, :, :lc].reshape(N, C, hp, wp)[:, :, 1:hp - 1, 1:wp - 1]
    return out


# ---------------------------------------------------------------------------
# Deterministic parameters (Conv2d + folded eval-mode BatchNorm)
# ---------------------------------------------------------------------------
def make_params(key, in_channels):
    keys = jax.random.split(key, 7)

    def conv_bn(k, cin, cout, ksize):
        kw_, kg, kb, km, kv = jax.random.split(k, 5)
        w = 0.1 * jax.random.normal(kw_, (cout, cin, ksize, ksize), jnp.float32)
        gamma = 1.0 + 0.1 * jax.random.normal(kg, (cout,), jnp.float32)
        beta = 0.1 * jax.random.normal(kb, (cout,), jnp.float32)
        mean = 0.1 * jax.random.normal(km, (cout,), jnp.float32)
        var = 1.0 + 0.5 * jax.random.uniform(kv, (cout,), jnp.float32)
        s = gamma * jax.lax.rsqrt(var + 1e-3)         # fold eval-mode BN
        return w * s[:, None, None, None], beta - mean * s

    p = {
        "b0": conv_bn(keys[0], in_channels, 8, 1),
        "b1a": conv_bn(keys[1], in_channels, 8, 1),
        "b1b": conv_bn(keys[2], 8, 8, 3),
        "b2a": conv_bn(keys[3], in_channels, 8, 1),
        "b2b": conv_bn(keys[4], 8, 12, 3),
        "b2c": conv_bn(keys[5], 12, 16, 3),
    }
    kcw, kcb = jax.random.split(keys[6])
    p["conv_w"] = 0.1 * jax.random.normal(kcw, (in_channels, 32, 1, 1), jnp.float32)
    p["conv_b"] = 0.1 * jax.random.normal(kcb, (in_channels,), jnp.float32)
    return p


# ---------------------------------------------------------------------------
# Pure-JAX reference (lax.conv) for verification
# ---------------------------------------------------------------------------
def ref_forward(x_nchw, params, scale=1.0, activation=True):
    x = jnp.transpose(x_nchw, (0, 2, 3, 1)).astype(jnp.float32)

    def conv(h, w_oihw, bias, pad, relu):
        w = jnp.transpose(w_oihw, (2, 3, 1, 0))       # HWIO
        y = jax.lax.conv_general_dilated(
            h, w, window_strides=(1, 1), padding=[(pad, pad), (pad, pad)],
            dimension_numbers=("NHWC", "HWIO", "NHWC"))
        y = y + bias
        return jnp.maximum(y, 0.0) if relu else y

    x0 = conv(x, *params["b0"], 0, True)
    x1 = conv(conv(x, *params["b1a"], 0, True), *params["b1b"], 1, True)
    x2 = conv(conv(conv(x, *params["b2a"], 0, True), *params["b2b"], 1, True),
              *params["b2c"], 1, True)
    cat = jnp.concatenate([x0, x1, x2], axis=-1)
    res = conv(cat, params["conv_w"], params["conv_b"], 0, False)
    out = x + scale * res
    if activation:
        out = jnp.maximum(out, 0.0)
    return jnp.transpose(out, (0, 3, 1, 2))


if __name__ == "__main__":
    key = jax.random.PRNGKey(0)
    k_x, k_p = jax.random.split(key)

    in_channels = 4
    x = jax.random.normal(k_x, (2, in_channels, 16, 16), jnp.float32)   # NCHW
    params = make_params(k_p, in_channels)
    scale, activation = 0.5, True

    out = inception_resnet_a_quart(x, params, scale=scale, activation=activation)
    out = jax.block_until_ready(out)

    ref = ref_forward(x, params, scale=scale, activation=activation)
    assert out.shape == ref.shape == x.shape, (out.shape, ref.shape)
    max_err = float(jnp.max(jnp.abs(out - ref)))
    assert jnp.allclose(out, ref, atol=1e-3, rtol=1e-3), f"max_err={max_err}"
    print("KERNEL_OK")
</pallas_src>

<mosaic_0001>
module attributes {stable_mosaic.version = 11 : i64} {
  func.func @_block_kernel(%arg0: i32, %arg1: memref<1x4x384xf32, #tpu.memory_space<vmem>>, %arg2: memref<1x384xf32, #tpu.memory_space<vmem>>, %arg3: memref<24x4xf32, #tpu.memory_space<vmem>>, %arg4: memref<24x1xf32, #tpu.memory_space<vmem>>, %arg5: memref<8x72xf32, #tpu.memory_space<vmem>>, %arg6: memref<8x1xf32, #tpu.memory_space<vmem>>, %arg7: memref<16x72xf32, #tpu.memory_space<vmem>>, %arg8: memref<16x1xf32, #tpu.memory_space<vmem>>, %arg9: memref<16x144xf32, #tpu.memory_space<vmem>>, %arg10: memref<16x1xf32, #tpu.memory_space<vmem>>, %arg11: memref<4x32xf32, #tpu.memory_space<vmem>>, %arg12: memref<4x1xf32, #tpu.memory_space<vmem>>, %arg13: memref<1x4x384xf32, #tpu.memory_space<vmem>>, %arg14: memref<8x640xf32, #tpu.memory_space<vmem>>, %arg15: memref<16x640xf32, #tpu.memory_space<vmem>>) attributes {dimension_semantics = [#tpu.dimension_semantics<parallel>], iteration_bounds = array<i64: 2>, scalar_prefetch = 0 : i64, scratch_operands = 2 : i64, tpu.core_type = #tpu.core_type<tc>, window_params = [{transform_indices = @transform_0, window_bounds = array<i64: 1, 4, 384>}, {pipeline_mode = #tpu.pipeline_mode<synchronous>, transform_indices = @transform_1, window_bounds = array<i64: 1, 384>}, {pipeline_mode = #tpu.pipeline_mode<synchronous>, transform_indices = @transform_2, window_bounds = array<i64: 24, 4>}, {pipeline_mode = #tpu.pipeline_mode<synchronous>, transform_indices = @transform_3, window_bounds = array<i64: 24, 1>}, {pipeline_mode = #tpu.pipeline_mode<synchronous>, transform_indices = @transform_4, window_bounds = array<i64: 8, 72>}, {pipeline_mode = #tpu.pipeline_mode<synchronous>, transform_indices = @transform_5, window_bounds = array<i64: 8, 1>}, {pipeline_mode = #tpu.pipeline_mode<synchronous>, transform_indices = @transform_6, window_bounds = array<i64: 16, 72>}, {pipeline_mode = #tpu.pipeline_mode<synchronous>, transform_indices = @transform_7, window_bounds = array<i64: 16, 1>}, {pipeline_mode = #tpu.pipeline_mode<synchronous>, transform_indices = @transform_8, window_bounds = array<i64: 16, 144>}, {pipeline_mode = #tpu.pipeline_mode<synchronous>, transform_indices = @transform_9, window_bounds = array<i64: 16, 1>}, {pipeline_mode = #tpu.pipeline_mode<synchronous>, transform_indices = @transform_10, window_bounds = array<i64: 4, 32>}, {pipeline_mode = #tpu.pipeline_mode<synchronous>, transform_indices = @transform_11, window_bounds = array<i64: 4, 1>}, {transform_indices = @transform_12, window_bounds = array<i64: 1, 4, 384>}]} {
    %cst = arith.constant 0.000000e+00 : f32
    %0 = vector.broadcast %cst : f32 to vector<8x128xf32>
    %c0 = arith.constant 0 : index
    %c0_0 = arith.constant 0 : index
    %1 = vector.load %arg14[%c0, %c0_0] : memref<8x640xf32, #tpu.memory_space<vmem>>, vector<8x128xf32>
    tpu.vector_store %arg14[%c0, %c0_0], %0 {strides = array<i32>} : memref<8x640xf32, #tpu.memory_space<vmem>>, vector<8x128xf32>,
    %cst_1 = arith.constant 0.000000e+00 : f32
    %2 = vector.broadcast %cst_1 : f32 to vector<8x128xf32>
    %c0_2 = arith.constant 0 : index
    %c512 = arith.constant 512 : index
    %3 = vector.load %arg14[%c0_2, %c512] : memref<8x640xf32, #tpu.memory_space<vmem>>, vector<8x128xf32>
    tpu.vector_store %arg14[%c0_2, %c512], %2 {strides = array<i32>} : memref<8x640xf32, #tpu.memory_space<vmem>>, vector<8x128xf32>,
    %cst_3 = arith.constant 0.000000e+00 : f32
    %4 = vector.broadcast %cst_3 : f32 to vector<16x128xf32>
    %c0_4 = arith.constant 0 : index
    %c0_5 = arith.constant 0 : index
    %5 = vector.load %arg15[%c0_4, %c0_5] : memref<16x640xf32, #tpu.memory_space<vmem>>, vector<16x128xf32>
    tpu.vector_store %arg15[%c0_4, %c0_5], %4 {strides = array<i32>} : memref<16x640xf32, #tpu.memory_space<vmem>>, vector<16x128xf32>,
    %cst_6 = arith.constant 0.000000e+00 : f32
    %6 = vector.broadcast %cst_6 : f32 to vector<16x128xf32>
    %c0_7 = arith.constant 0 : index
    %c512_8 = arith.constant 512 : index
    %7 = vector.load %arg15[%c0_7, %c512_8] : memref<16x640xf32, #tpu.memory_space<vmem>>, vector<16x128xf32>
    tpu.vector_store %arg15[%c0_7, %c512_8], %6 {strides = array<i32>} : memref<16x640xf32, #tpu.memory_space<vmem>>, vector<16x128xf32>,
    %c0_9 = arith.constant 0 : index
    %c0_10 = arith.constant 0 : index
    %c0_11 = arith.constant 0 : index
    %8 = vector.load %arg1[%c0_9, %c0_10, %c0_11] : memref<1x4x384xf32, #tpu.memory_space<vmem>>, vector<1x4x384xf32>
    %9 = vector.shape_cast %8 : vector<1x4x384xf32> to vector<4x384xf32>
    %c0_12 = arith.constant 0 : index
    %c0_13 = arith.constant 0 : index
    %10 = vector.load %arg2[%c0_12, %c0_13] : memref<1x384xf32, #tpu.memory_space<vmem>>, vector<1x384xf32>
    %c0_14 = arith.constant 0 : index
    %c0_15 = arith.constant 0 : index
    %11 = vector.load %arg3[%c0_14, %c0_15] : memref<24x4xf32, #tpu.memory_space<vmem>>, vector<24x4xf32>
    %cst_16 = arith.constant dense<0.000000e+00> : vector<24x384xf32>
    %12 = tpu.matmul %11, %9, %cst_16 {dimension_numbers = #tpu.dot_dimension_numbers<[1], [0], [0], [1], [0, 0, 1, 1], [], []>} : vector<24x4xf32>, vector<4x384xf32>, vector<24x384xf32> -> vector<24x384xf32>
    %c0_17 = arith.constant 0 : index
    %c0_18 = arith.constant 0 : index
    %13 = vector.load %arg4[%c0_17, %c0_18] : memref<24x1xf32, #tpu.memory_space<vmem>>, vector<24x1xf32>
    %14 = vector.broadcast %13 : vector<24x1xf32> to vector<24x384xf32>
    %15 = arith.addf %12, %14 : vector<24x384xf32>
    %cst_19 = arith.constant 0.000000e+00 : f32
    %16 = vector.broadcast %cst_19 : f32 to vector<24x384xf32>
    %17 = arith.maximumf %15, %16 : vector<24x384xf32>
    %18 = vector.broadcast %10 : vector<1x384xf32> to vector<24x384xf32>
    %19 = arith.mulf %17, %18 : vector<24x384xf32>
    %20 = vector.extract_strided_slice %19 {offsets = [8, 0], sizes = [8, 384], strides = [1, 1]} : vector<24x384xf32> to vector<8x384xf32>
    %c0_20 = arith.constant 0 : index
    %c128 = arith.constant 128 : index
    %21 = vector.load %arg14[%c0_20, %c128] : memref<8x640xf32, #tpu.memory_space<vmem>>, vector<8x384xf32>
    tpu.vector_store %arg14[%c0_20, %c128], %20 {strides = array<i32>} : memref<8x640xf32, #tpu.memory_space<vmem>>, vector<8x384xf32>,
    %c0_21 = arith.constant 0 : index
    %c109 = arith.constant 109 : index
    %22 = vector.load %arg14[%c0_21, %c109] : memref<8x640xf32, #tpu.memory_space<vmem>>, vector<8x384xf32>
    %c0_22 = arith.constant 0 : index
    %c110 = arith.constant 110 : index
    %23 = vector.load %arg14[%c0_22, %c110] : memref<8x640xf32, #tpu.memory_space<vmem>>, vector<8x384xf32>
    %c0_23 = arith.constant 0 : index
    %c111 = arith.constant 111 : index
    %24 = vector.load %arg14[%c0_23, %c111] : memref<8x640xf32, #tpu.memory_space<vmem>>, vector<8x384xf32>
    %c0_24 = arith.constant 0 : index
    %c127 = arith.constant 127 : index
    %25 = vector.load %arg14[%c0_24, %c127] : memref<8x640xf32, #tpu.memory_space<vmem>>, vector<8x384xf32>
    %c0_25 = arith.constant 0 : index
    %c128_26 = arith.constant 128 : index
    %26 = vector.load %arg14[%c0_25, %c128_26] : memref<8x640xf32, #tpu.memory_space<vmem>>, vector<8x384xf32>
    %c0_27 = arith.constant 0 : index
    %c129 = arith.constant 129 : index
    %27 = vector.load %arg14[%c0_27, %c129] : memref<8x640xf32, #tpu.memory_space<vmem>>, vector<8x384xf32>
    %c0_28 = arith.constant 0 : index
    %c145 = arith.constant 145 : index
    %28 = vector.load %arg14[%c0_28, %c145] : memref<8x640xf32, #tpu.memory_space<vmem>>, vector<8x384xf32>
    %c0_29 = arith.constant 0 : index
    %c146 = arith.constant 146 : index
    %29 = vector.load %arg14[%c0_29, %c146] : memref<8x640xf32, #tpu.memory_space<vmem>>, vector<8x384xf32>
    %c0_30 = arith.constant 0 : index
    %c147 = arith.constant 147 : index
    %30 = vector.load %arg14[%c0_30, %c147] : memref<8x640xf32, #tpu.memory_space<vmem>>, vector<8x384xf32>
    %31 = tpu.concatenate %22, %23, %24, %25, %26, %27, %28, %29, %30 in 0 : vector<8x384xf32>, vector<8x384xf32>, vector<8x384xf32>, vector<8x384xf32>, vector<8x384xf32>, vector<8x384xf32>, vector<8x384xf32>, vector<8x384xf32>, vector<8x384xf32> -> vector<72x384xf32>
    %c0_31 = arith.constant 0 : index
    %c0_32 = arith.constant 0 : index
    %32 = vector.load %arg5[%c0_31, %c0_32] : memref<8x72xf32, #tpu.memory_space<vmem>>, vector<8x72xf32>
    %cst_33 = arith.constant dense<0.000000e+00> : vector<8x384xf32>
    %33 = tpu.matmul %32, %31, %cst_33 {dimension_numbers = #tpu.dot_dimension_numbers<[1], [0], [0], [1], [0, 0, 1, 1], [], []>} : vector<8x72xf32>, vector<72x384xf32>, vector<8x384xf32> -> vector<8x384xf32>
    %c0_34 = arith.constant 0 : index
    %c0_35 = arith.constant 0 : index
    %34 = vector.load %arg6[%c0_34, %c0_35] : memref<8x1xf32, #tpu.memory_space<vmem>>, vector<8x1xf32>
    %35 = vector.broadcast %34 : vector<8x1xf32> to vector<8x384xf32>
    %36 = arith.addf %33, %35 : vector<8x384xf32>
    %cst_36 = arith.constant 0.000000e+00 : f32
    %37 = vector.broadcast %cst_36 : f32 to vector<8x384xf32>
    %38 = arith.maximumf %36, %37 : vector<8x384xf32>
    %39 = vector.extract_strided_slice %19 {offsets = [16, 0], sizes = [8, 384], strides = [1, 1]} : vector<24x384xf32> to vector<8x384xf32>
    %c0_37 = arith.constant 0 : index
    %c128_38 = arith.constant 128 : index
    %40 = vector.load %arg14[%c0_37, %c128_38] : memref<8x640xf32, #tpu.memory_space<vmem>>, vector<8x384xf32>
    tpu.vector_store %arg14[%c0_37, %c128_38], %39 {strides = array<i32>} : memref<8x640xf32, #tpu.memory_space<vmem>>, vector<8x384xf32>,
    %c0_39 = arith.constant 0 : index
    %c109_40 = arith.constant 109 : index
    %41 = vector.load %arg14[%c0_39, %c109_40] : memref<8x640xf32, #tpu.memory_space<vmem>>, vector<8x384xf32>
    %c0_41 = arith.constant 0 : index
    %c110_42 = arith.constant 110 : index
    %42 = vector.load %arg14[%c0_41, %c110_42] : memref<8x640xf32, #tpu.memory_space<vmem>>, vector<8x384xf32>
    %c0_43 = arith.constant 0 : index
    %c111_44 = arith.constant 111 : index
    %43 = vector.load %arg14[%c0_43, %c111_44] : memref<8x640xf32, #tpu.memory_space<vmem>>, vector<8x384xf32>
    %c0_45 = arith.constant 0 : index
    %c127_46 = arith.constant 127 : index
    %44 = vector.load %arg14[%c0_45, %c127_46] : memref<8x640xf32, #tpu.memory_space<vmem>>, vector<8x384xf32>
    %c0_47 = arith.constant 0 : index
    %c128_48 = arith.constant 128 : index
    %45 = vector.load %arg14[%c0_47, %c128_48] : memref<8x640xf32, #tpu.memory_space<vmem>>, vector<8x384xf32>
    %c0_49 = arith.constant 0 : index
    %c129_50 = arith.constant 129 : index
    %46 = vector.load %arg14[%c0_49, %c129_50] : memref<8x640xf32, #tpu.memory_space<vmem>>, vector<8x384xf32>
    %c0_51 = arith.constant 0 : index
    %c145_52 = arith.constant 145 : index
    %47 = vector.load %arg14[%c0_51, %c145_52] : memref<8x640xf32, #tpu.memory_space<vmem>>, vector<8x384xf32>
    %c0_53 = arith.constant 0 : index
    %c146_54 = arith.constant 146 : index
    %48 = vector.load %arg14[%c0_53, %c146_54] : memref<8x640xf32, #tpu.memory_space<vmem>>, vector<8x384xf32>
    %c0_55 = arith.constant 0 : index
    %c147_56 = arith.constant 147 : index
    %49 = vector.load %arg14[%c0_55, %c147_56] : memref<8x640xf32, #tpu.memory_space<vmem>>, vector<8x384xf32>
    %50 = tpu.concatenate %41, %42, %43, %44, %45, %46, %47, %48, %49 in 0 : vector<8x384xf32>, vector<8x384xf32>, vector<8x384xf32>, vector<8x384xf32>, vector<8x384xf32>, vector<8x384xf32>, vector<8x384xf32>, vector<8x384xf32>, vector<8x384xf32> -> vector<72x384xf32>
    %c0_57 = arith.constant 0 : index
    %c0_58 = arith.constant 0 : index
    %51 = vector.load %arg7[%c0_57, %c0_58] : memref<16x72xf32, #tpu.memory_space<vmem>>, vector<16x72xf32>
    %cst_59 = arith.constant dense<0.000000e+00> : vector<16x384xf32>
    %52 = tpu.matmul %51, %50, %cst_59 {dimension_numbers = #tpu.dot_dimension_numbers<[1], [0], [0], [1], [0, 0, 1, 1], [], []>} : vector<16x72xf32>, vector<72x384xf32>, vector<16x384xf32> -> vector<16x384xf32>
    %c0_60 = arith.constant 0 : index
    %c0_61 = arith.constant 0 : index
    %53 = vector.load %arg8[%c0_60, %c0_61] : memref<16x1xf32, #tpu.memory_space<vmem>>, vector<16x1xf32>
    %54 = vector.broadcast %53 : vector<16x1xf32> to vector<16x384xf32>
    %55 = arith.addf %52, %54 : vector<16x384xf32>
    %cst_62 = arith.constant 0.000000e+00 : f32
    %56 = vector.broadcast %cst_62 : f32 to vector<16x384xf32>
    %57 = arith.maximumf %55, %56 : vector<16x384xf32>
    %58 = vector.broadcast %10 : vector<1x384xf32> to vector<16x384xf32>
    %59 = arith.mulf %57, %58 : vector<16x384xf32>
    %c0_63 = arith.constant 0 : index
    %c128_64 = arith.constant 128 : index
    %60 = vector.load %arg15[%c0_63, %c128_64] : memref<16x640xf32, #tpu.memory_space<vmem>>, vector<16x384xf32>
    tpu.vector_store %arg15[%c0_63, %c128_64], %59 {strides = array<i32>} : memref<16x640xf32, #tpu.memory_space<vmem>>, vector<16x384xf32>,
    %c0_65 = arith.constant 0 : index
    %c109_66 = arith.constant 109 : index
    %61 = vector.load %arg15[%c0_65, %c109_66] : memref<16x640xf32, #tpu.memory_space<vmem>>, vector<16x384xf32>
    %c0_67 = arith.constant 0 : index
    %c110_68 = arith.constant 110 : index
    %62 = vector.load %arg15[%c0_67, %c110_68] : memref<16x640xf32, #tpu.memory_space<vmem>>, vector<16x384xf32>
    %c0_69 = arith.constant 0 : index
    %c111_70 = arith.constant 111 : index
    %63 = vector.load %arg15[%c0_69, %c111_70] : memref<16x640xf32, #tpu.memory_space<vmem>>, vector<16x384xf32>
    %c0_71 = arith.constant 0 : index
    %c127_72 = arith.constant 127 : index
    %64 = vector.load %arg15[%c0_71, %c127_72] : memref<16x640xf32, #tpu.memory_space<vmem>>, vector<16x384xf32>
    %c0_73 = arith.constant 0 : index
    %c128_74 = arith.constant 128 : index
    %65 = vector.load %arg15[%c0_73, %c128_74] : memref<16x640xf32, #tpu.memory_space<vmem>>, vector<16x384xf32>
    %c0_75 = arith.constant 0 : index
    %c129_76 = arith.constant 129 : index
    %66 = vector.load %arg15[%c0_75, %c129_76] : memref<16x640xf32, #tpu.memory_space<vmem>>, vector<16x384xf32>
    %c0_77 = arith.constant 0 : index
    %c145_78 = arith.constant 145 : index
    %67 = vector.load %arg15[%c0_77, %c145_78] : memref<16x640xf32, #tpu.memory_space<vmem>>, vector<16x384xf32>
    %c0_79 = arith.constant 0 : index
    %c146_80 = arith.constant 146 : index
    %68 = vector.load %arg15[%c0_79, %c146_80] : memref<16x640xf32, #tpu.memory_space<vmem>>, vector<16x384xf32>
    %c0_81 = arith.constant 0 : index
    %c147_82 = arith.constant 147 : index
    %69 = vector.load %arg15[%c0_81, %c147_82] : memref<16x640xf32, #tpu.memory_space<vmem>>, vector<16x384xf32>
    %70 = tpu.concatenate %61, %62, %63, %64, %65, %66, %67, %68, %69 in 0 : vector<16x384xf32>, vector<16x384xf32>, vector<16x384xf32>, vector<16x384xf32>, vector<16x384xf32>, vector<16x384xf32>, vector<16x384xf32>, vector<16x384xf32>, vector<16x384xf32> -> vector<144x384xf32>
    %c0_83 = arith.constant 0 : index
    %c0_84 = arith.constant 0 : index
    %71 = vector.load %arg9[%c0_83, %c0_84] : memref<16x144xf32, #tpu.memory_space<vmem>>, vector<16x144xf32>
    %cst_85 = arith.constant dense<0.000000e+00> : vector<16x384xf32>
    %72 = tpu.matmul %71, %70, %cst_85 {dimension_numbers = #tpu.dot_dimension_numbers<[1], [0], [0], [1], [0, 0, 1, 1], [], []>} : vector<16x144xf32>, vector<144x384xf32>, vector<16x384xf32> -> vector<16x384xf32>
    %c0_86 = arith.constant 0 : index
    %c0_87 = arith.constant 0 : index
    %73 = vector.load %arg10[%c0_86, %c0_87] : memref<16x1xf32, #tpu.memory_space<vmem>>, vector<16x1xf32>
    %74 = vector.broadcast %73 : vector<16x1xf32> to vector<16x384xf32>
    %75 = arith.addf %72, %74 : vector<16x384xf32>
    %cst_88 = arith.constant 0.000000e+00 : f32
    %76 = vector.broadcast %cst_88 : f32 to vector<16x384xf32>
    %77 = arith.maximumf %75, %76 : vector<16x384xf32>
    %78 = vector.extract_strided_slice %19 {offsets = [0, 0], sizes = [8, 384], strides = [1, 1]} : vector<24x384xf32> to vector<8x384xf32>
    %79 = tpu.concatenate %78, %38, %77 in 0 : vector<8x384xf32>, vector<8x384xf32>, vector<16x384xf32> -> vector<32x384xf32>
    %c0_89 = arith.constant 0 : index
    %c0_90 = arith.constant 0 : index
    %80 = vector.load %arg11[%c0_89, %c0_90] : memref<4x32xf32, #tpu.memory_space<vmem>>, vector<4x32xf32>
    %cst_91 = arith.constant dense<0.000000e+00> : vector<4x384xf32>
    %81 = tpu.matmul %80, %79, %cst_91 {dimension_numbers = #tpu.dot_dimension_numbers<[1], [0], [0], [1], [0, 0, 1, 1], [], []>} : vector<4x32xf32>, vector<32x384xf32>, vector<4x384xf32> -> vector<4x384xf32>
    %c0_92 = arith.constant 0 : index
    %c0_93 = arith.constant 0 : index
    %82 = vector.load %arg12[%c0_92, %c0_93] : memref<4x1xf32, #tpu.memory_space<vmem>>, vector<4x1xf32>
    %83 = vector.broadcast %82 : vector<4x1xf32> to vector<4x384xf32>
    %84 = arith.addf %81, %83 : vector<4x384xf32>
    %cst_94 = arith.constant 5.000000e-01 : f32
    %85 = vector.broadcast %cst_94 : f32 to vector<4x384xf32>
    %86 = arith.mulf %85, %84 : vector<4x384xf32>
    %87 = arith.addf %9, %86 : vector<4x384xf32>
    %cst_95 = arith.constant 0.000000e+00 : f32
    %88 = vector.broadcast %cst_95 : f32 to vector<4x384xf32>
    %89 = arith.maximumf %87, %88 : vector<4x384xf32>
    %c0_96 = arith.constant 0 : index
    %c0_97 = arith.constant 0 : index
    %c0_98 = arith.constant 0 : index
    %90 = vector.load %arg13[%c0_96, %c0_97, %c0_98] : memref<1x4x384xf32, #tpu.memory_space<vmem>>, vector<1x4x384xf32>
    %91 = vector.shape_cast %90 : vector<1x4x384xf32> to vector<4x384xf32>
    %92 = vector.shape_cast %89 : vector<4x384xf32> to vector<1x4x384xf32>
    tpu.vector_store %arg13[%c0_96, %c0_97, %c0_98], %92 {strides = array<i32>} : memref<1x4x384xf32, #tpu.memory_space<vmem>>, vector<1x4x384xf32>,
    return
  }
  func.func @transform_0(%arg0: i32) -> (i32, i32, i32) {
    %c0_i32 = arith.constant 0 : i32
    %c0_i32_0 = arith.constant 0 : i32
    %c0_i32_1 = arith.constant 0 : i32
    return %arg0, %c0_i32, %c0_i32_0 : i32, i32, i32
  }
  func.func @transform_1(%arg0: i32) -> (i32, i32) {
    %c0_i32 = arith.constant 0 : i32
    %c0_i32_0 = arith.constant 0 : i32
    %c0_i32_1 = arith.constant 0 : i32
    return %c0_i32, %c0_i32_0 : i32, i32
  }
  func.func @transform_2(%arg0: i32) -> (i32, i32) {
    %c0_i32 = arith.constant 0 : i32
    %c0_i32_0 = arith.constant 0 : i32
    %c0_i32_1 = arith.constant 0 : i32
    return %c0_i32, %c0_i32_0 : i32, i32
  }
  func.func @transform_3(%arg0: i32) -> (i32, i32) {
    %c0_i32 = arith.constant 0 : i32
    %c0_i32_0 = arith.constant 0 : i32
    %c0_i32_1 = arith.constant 0 : i32
    return %c0_i32, %c0_i32_0 : i32, i32
  }
  func.func @transform_4(%arg0: i32) -> (i32, i32) {
    %c0_i32 = arith.constant 0 : i32
    %c0_i32_0 = arith.constant 0 : i32
    %c0_i32_1 = arith.constant 0 : i32
    return %c0_i32, %c0_i32_0 : i32, i32
  }
  func.func @transform_5(%arg0: i32) -> (i32, i32) {
    %c0_i32 = arith.constant 0 : i32
    %c0_i32_0 = arith.constant 0 : i32
    %c0_i32_1 = arith.constant 0 : i32
    return %c0_i32, %c0_i32_0 : i32, i32
  }
  func.func @transform_6(%arg0: i32) -> (i32, i32) {
    %c0_i32 = arith.constant 0 : i32
    %c0_i32_0 = arith.constant 0 : i32
    %c0_i32_1 = arith.constant 0 : i32
    return %c0_i32, %c0_i32_0 : i32, i32
  }
  func.func @transform_7(%arg0: i32) -> (i32, i32) {
    %c0_i32 = arith.constant 0 : i32
    %c0_i32_0 = arith.constant 0 : i32
    %c0_i32_1 = arith.constant 0 : i32
    return %c0_i32, %c0_i32_0 : i32, i32
  }
  func.func @transform_8(%arg0: i32) -> (i32, i32) {
    %c0_i32 = arith.constant 0 : i32
    %c0_i32_0 = arith.constant 0 : i32
    %c0_i32_1 = arith.constant 0 : i32
    return %c0_i32, %c0_i32_0 : i32, i32
  }
  func.func @transform_9(%arg0: i32) -> (i32, i32) {
    %c0_i32 = arith.constant 0 : i32
    %c0_i32_0 = arith.constant 0 : i32
    %c0_i32_1 = arith.constant 0 : i32
    return %c0_i32, %c0_i32_0 : i32, i32
  }
  func.func @transform_10(%arg0: i32) -> (i32, i32) {
    %c0_i32 = arith.constant 0 : i32
    %c0_i32_0 = arith.constant 0 : i32
    %c0_i32_1 = arith.constant 0 : i32
    return %c0_i32, %c0_i32_0 : i32, i32
  }
  func.func @transform_11(%arg0: i32) -> (i32, i32) {
    %c0_i32 = arith.constant 0 : i32
    %c0_i32_0 = arith.constant 0 : i32
    %c0_i32_1 = arith.constant 0 : i32
    return %c0_i32, %c0_i32_0 : i32, i32
  }
  func.func @transform_12(%arg0: i32) -> (i32, i32, i32) {
    %c0_i32 = arith.constant 0 : i32
    %c0_i32_0 = arith.constant 0 : i32
    %c0_i32_1 = arith.constant 0 : i32
    return %arg0, %c0_i32, %c0_i32_0 : i32, i32, i32
  }
}

</mosaic_0001>

<llo_original>
// kernel: tpu_custom_call.1
$region0: #{tpu_custom_call.1}
  #allocation0 [shape = 'u32[]', space=smem, size = 0x4, offset = 0x4, fixed_abs, tag = 'smem constant byte address 0x4 - core index']
  #allocation1 [shape = 'u32[72,128]{1,0:T(1,128)}', space=vmem, size = 0x9000, scoped, tag = 'internal scratch']
  #allocation2 [shape = 'f32[8,640]{1,0:T(8,128)}', space=vmem, size = 0x5000, scoped, tag = 'scratch operand']
  #allocation3 [shape = 'f32[16,640]{1,0:T(8,128)}', space=vmem, size = 0xa000, scoped, tag = 'scratch operand']
  %s0 = inlined_call_operand.vmem [shape: f32[2,4,384], index: 0, kind: input, shape index: {}]
  %s1 = inlined_call_operand.vmem [shape: f32[1,384], index: 1, kind: input, shape index: {}]
  %s2 = inlined_call_operand.vmem [shape: f32[24,4], index: 2, kind: input, shape index: {}]
  %s3 = inlined_call_operand.vmem [shape: f32[24,1], index: 3, kind: input, shape index: {}]
  %s4 = inlined_call_operand.vmem [shape: f32[8,72], index: 4, kind: input, shape index: {}]
  %s5 = inlined_call_operand.vmem [shape: f32[8,1], index: 5, kind: input, shape index: {}]
  %s6 = inlined_call_operand.vmem [shape: f32[16,72], index: 6, kind: input, shape index: {}]
  %s7 = inlined_call_operand.vmem [shape: f32[16,1], index: 7, kind: input, shape index: {}]
  %s8 = inlined_call_operand.vmem [shape: f32[16,144], index: 8, kind: input, shape index: {}]
  %s9 = inlined_call_operand.vmem [shape: f32[16,1], index: 9, kind: input, shape index: {}]
  %s10 = inlined_call_operand.vmem [shape: f32[4,32], index: 10, kind: input, shape index: {}]
  %s11 = inlined_call_operand.vmem [shape: f32[4,1], index: 11, kind: input, shape index: {}]
  %s12 = inlined_call_operand.hbm [shape: f32[2,4,384], index: 12, kind: output, shape index: {}]
  %s13 = sld [smem:[#allocation0]]
  $region81: #{tpu_custom_call.1} parent=0
    _
  %s15 = ssub.s32 1, %s13
  %s16 = scalar_select 0, %s15, %s13
  $region1: #{tpu_custom_call.1} parent=0
    #allocation4 [shape = 'u8[12288]{0}', space=vmem, size = 0x3000, scoped, tag = 'output window, operand 0']
    #allocation5 [shape = 's32[2]{0}', space=sflag, size = 0x8, scoped, tag = 'scoped memory for tpu_custom_call.1']
    %17 = vsyncpa [#allocation5], 0
    %s18 = scalar_lea.sflag [#allocation5], 1
    %19 = vsyncpa %s18, 0
    loop: start=0, step=1, limit=4
    $region2: #{tpu_custom_call.1} parent=1 // loop_pre_header
      _
    $region3: #{tpu_custom_call.1} parent=1 // loop_header
      %s21 = sphi 0, %s25
      %p22 = scmp.ge.s32.totalorder %s21, 4
      %s31 = sphi 0, %s33
      %s34 = sphi 0, %s31
      %s35 = sphi 0, %s34
      %s51 = sphi 0, %s35
      %s55 = sphi 0, %s55
      %s57 = sphi 0, %s55
      %s58 = sphi 0, %s57
      %s72 = sphi 0, %s58
      %s76 = sphi 0, %s76
      %s78 = sphi 0, %s76
      %s79 = sphi 0, %s78
      %s93 = sphi 0, %s79
      %s97 = sphi 0, %s97
      %s99 = sphi 0, %s97
      %s100 = sphi 0, %s99
      %s114 = sphi 0, %s100
      %s118 = sphi 0, %s118
      %s120 = sphi 0, %s118
      %s121 = sphi 0, %s120
      %s135 = sphi 0, %s121
      %s139 = sphi 0, %s139
      %s141 = sphi 0, %s139
      %s142 = sphi 0, %s141
      %s156 = sphi 0, %s142
      %s160 = sphi 0, %s160
      %s162 = sphi 0, %s160
      %s163 = sphi 0, %s162
      %s177 = sphi 0, %s163
      %s181 = sphi 0, %s181
      %s183 = sphi 0, %s181
      %s184 = sphi 0, %s183
      %s198 = sphi 0, %s184
      %s202 = sphi 0, %s202
      %s204 = sphi 0, %s202
      %s205 = sphi 0, %s204
      %s219 = sphi 0, %s205
      %s223 = sphi 0, %s223
      %s225 = sphi 0, %s223
      %s226 = sphi 0, %s225
      %s240 = sphi 0, %s226
      %s244 = sphi 0, %s244
      %s246 = sphi 0, %s244
      %s247 = sphi 0, %s246
      %s261 = sphi 0, %s247
      %s265 = sphi 0, %s265
      %s267 = sphi 0, %s265
      %s268 = sphi 0, %s267
      %s282 = sphi 0, %s268
      %s288 = sphi 0, %s290
      %s291 = sphi 0, %s288
      %s292 = sphi 0, %s291
      %s308 = sphi 0, %s292
    $region4: #{tpu_custom_call.1} parent=1 // loop_header_branch
      %24 = sbr.rel (%p22) target = $region8
    $region5: #{tpu_custom_call.1} parent=1 // loop_body
      %s26 = ssub.s32 %s21, 1
      %s27 = ssub.s32 %s21, 2
      %s28 = sadd.s32 %s21, 1
      %s29 = ssub.s32 %s21, %s28
      %p30 = scmp.eq.s32.totalorder %s29, 0
      %s32 = sadd.s32 %s31, 1
      %s33 = scalar_select %p30, %s31, %s32
      %p36 = pneg %p30
      %p37 = scmp.eq.s32.totalorder %s21, 1
      %p38 = por %p36, %p37
      %p39 = scmp.ne.s32.totalorder %s31, %s34
      %p40 = scmp.eq.s32.totalorder %s21, 0
      %p41 = por %p39, %p40
      %p42 = scmp.ne.s32.totalorder %s31, %s34
      %p43 = scmp.eq.s32.totalorder %s26, 1
      %p44 = por %p42, %p43
      %p45 = scmp.ne.s32.totalorder %s34, %s35
      %p46 = scmp.eq.s32.totalorder %s26, 0
      %p47 = por %p45, %p46
      %p48 = scmp.ne.s32.totalorder %s34, %s35
      %p49 = scmp.eq.s32.totalorder %s27, 1
      %p50 = por %p48, %p49
      %p52 = scmp.ne.s32.totalorder %s35, %s51
      %p53 = scmp.eq.s32.totalorder %s27, 0
      %p54 = por %p52, %p53
      %s56 = sadd.s32 %s55, 1
      %p59 = scmp.eq.s32.totalorder %s21, 1
      %p60 = scmp.ne.s32.totalorder %s55, %s57
      %p61 = scmp.eq.s32.totalorder %s21, 0
      %p62 = por %p60, %p61
      %p63 = scmp.ne.s32.totalorder %s55, %s57
      %p64 = scmp.eq.s32.totalorder %s26, 1
      %p65 = por %p63, %p64
      %p66 = scmp.ne.s32.totalorder %s57, %s58
      %p67 = scmp.eq.s32.totalorder %s26, 0
      %p68 = por %p66, %p67
      %p69 = scmp.ne.s32.totalorder %s57, %s58
      %p70 = scmp.eq.s32.totalorder %s27, 1
      %p71 = por %p69, %p70
      %p73 = scmp.ne.s32.totalorder %s58, %s72
      %p74 = scmp.eq.s32.totalorder %s27, 0
      %p75 = por %p73, %p74
      %s77 = sadd.s32 %s76, 1
      %p80 = scmp.eq.s32.totalorder %s21, 1
      %p81 = scmp.ne.s32.totalorder %s76, %s78
      %p82 = scmp.eq.s32.totalorder %s21, 0
      %p83 = por %p81, %p82
      %p84 = scmp.ne.s32.totalorder %s76, %s78
      %p85 = scmp.eq.s32.totalorder %s26, 1
      %p86 = por %p84, %p85
      %p87 = scmp.ne.s32.totalorder %s78, %s79
      %p88 = scmp.eq.s32.totalorder %s26, 0
      %p89 = por %p87, %p88
      %p90 = scmp.ne.s32.totalorder %s78, %s79
      %p91 = scmp.eq.s32.totalorder %s27, 1
      %p92 = por %p90, %p91
      %p94 = scmp.ne.s32.totalorder %s79, %s93
      %p95 = scmp.eq.s32.totalorder %s27, 0
      %p96 = por %p94, %p95
      %s98 = sadd.s32 %s97, 1
      %p101 = scmp.eq.s32.totalorder %s21, 1
      %p102 = scmp.ne.s32.totalorder %s97, %s99
      %p103 = scmp.eq.s32.totalorder %s21, 0
      %p104 = por %p102, %p103
      %p105 = scmp.ne.s32.totalorder %s97, %s99
      %p106 = scmp.eq.s32.totalorder %s26, 1
      %p107 = por %p105, %p106
      %p108 = scmp.ne.s32.totalorder %s99, %s100
      %p109 = scmp.eq.s32.totalorder %s26, 0
      %p110 = por %p108, %p109
      %p111 = scmp.ne.s32.totalorder %s99, %s100
      %p112 = scmp.eq.s32.totalorder %s27, 1
      %p113 = por %p111, %p112
      %p115 = scmp.ne.s32.totalorder %s100, %s114
      %p116 = scmp.eq.s32.totalorder %s27, 0
      %p117 = por %p115, %p116
      %s119 = sadd.s32 %s118, 1
      %p122 = scmp.eq.s32.totalorder %s21, 1
      %p123 = scmp.ne.s32.totalorder %s118, %s120
      %p124 = scmp.eq.s32.totalorder %s21, 0
      %p125 = por %p123, %p124
      %p126 = scmp.ne.s32.totalorder %s118, %s120
      %p127 = scmp.eq.s32.totalorder %s26, 1
      %p128 = por %p126, %p127
      %p129 = scmp.ne.s32.totalorder %s120, %s121
      %p130 = scmp.eq.s32.totalorder %s26, 0
      %p131 = por %p129, %p130
      %p132 = scmp.ne.s32.totalorder %s120, %s121
      %p133 = scmp.eq.s32.totalorder %s27, 1
      %p134 = por %p132, %p133
      %p136 = scmp.ne.s32.totalorder %s121, %s135
      %p137 = scmp.eq.s32.totalorder %s27, 0
      %p138 = por %p136, %p137
      %s140 = sadd.s32 %s139, 1
      %p143 = scmp.eq.s32.totalorder %s21, 1
      %p144 = scmp.ne.s32.totalorder %s139, %s141
      %p145 = scmp.eq.s32.totalorder %s21, 0
      %p146 = por %p144, %p145
      %p147 = scmp.ne.s32.totalorder %s139, %s141
      %p148 = scmp.eq.s32.totalorder %s26, 1
      %p149 = por %p147, %p148
      %p150 = scmp.ne.s32.totalorder %s141, %s142
      %p151 = scmp.eq.s32.totalorder %s26, 0
      %p152 = por %p150, %p151
      %p153 = scmp.ne.s32.totalorder %s141, %s142
      %p154 = scmp.eq.s32.totalorder %s27, 1
      %p155 = por %p153, %p154
      %p157 = scmp.ne.s32.totalorder %s142, %s156
      %p158 = scmp.eq.s32.totalorder %s27, 0
      %p159 = por %p157, %p158
      %s161 = sadd.s32 %s160, 1
      %p164 = scmp.eq.s32.totalorder %s21, 1
      %p165 = scmp.ne.s32.totalorder %s160, %s162
      %p166 = scmp.eq.s32.totalorder %s21, 0
      %p167 = por %p165, %p166
      %p168 = scmp.ne.s32.totalorder %s160, %s162
      %p169 = scmp.eq.s32.totalorder %s26, 1
      %p170 = por %p168, %p169
      %p171 = scmp.ne.s32.totalorder %s162, %s163
      %p172 = scmp.eq.s32.totalorder %s26, 0
      %p173 = por %p171, %p172
      %p174 = scmp.ne.s32.totalorder %s162, %s163
      %p175 = scmp.eq.s32.totalorder %s27, 1
      %p176 = por %p174, %p175
      %p178 = scmp.ne.s32.totalorder %s163, %s177
      %p179 = scmp.eq.s32.totalorder %s27, 0
      %p180 = por %p178, %p179
      %s182 = sadd.s32 %s181, 1
      %p185 = scmp.eq.s32.totalorder %s21, 1
      %p186 = scmp.ne.s32.totalorder %s181, %s183
      %p187 = scmp.eq.s32.totalorder %s21, 0
      %p188 = por %p186, %p187
      %p189 = scmp.ne.s32.totalorder %s181, %s183
      %p190 = scmp.eq.s32.totalorder %s26, 1
      %p191 = por %p189, %p190
      %p192 = scmp.ne.s32.totalorder %s183, %s184
      %p193 = scmp.eq.s32.totalorder %s26, 0
      %p194 = por %p192, %p193
      %p195 = scmp.ne.s32.totalorder %s183, %s184
      %p196 = scmp.eq.s32.totalorder %s27, 1
      %p197 = por %p195, %p196
      %p199 = scmp.ne.s32.totalorder %s184, %s198
      %p200 = scmp.eq.s32.totalorder %s27, 0
      %p201 = por %p199, %p200
      %s203 = sadd.s32 %s202, 1
      %p206 = scmp.eq.s32.totalorder %s21, 1
      %p207 = scmp.ne.s32.totalorder %s202, %s204
      %p208 = scmp.eq.s32.totalorder %s21, 0
      %p209 = por %p207, %p208
      %p210 = scmp.ne.s32.totalorder %s202, %s204
      %p211 = scmp.eq.s32.totalorder %s26, 1
      %p212 = por %p210, %p211
      %p213 = scmp.ne.s32.totalorder %s204, %s205
      %p214 = scmp.eq.s32.totalorder %s26, 0
      %p215 = por %p213, %p214
      %p216 = scmp.ne.s32.totalorder %s204, %s205
      %p217 = scmp.eq.s32.totalorder %s27, 1
      %p218 = por %p216, %p217
      %p220 = scmp.ne.s32.totalorder %s205, %s219
      %p221 = scmp.eq.s32.totalorder %s27, 0
      %p222 = por %p220, %p221
      %s224 = sadd.s32 %s223, 1
      %p227 = scmp.eq.s32.totalorder %s21, 1
      %p228 = scmp.ne.s32.totalorder %s223, %s225
      %p229 = scmp.eq.s32.totalorder %s21, 0
      %p230 = por %p228, %p229
      %p231 = scmp.ne.s32.totalorder %s223, %s225
      %p232 = scmp.eq.s32.totalorder %s26, 1
      %p233 = por %p231, %p232
      %p234 = scmp.ne.s32.totalorder %s225, %s226
      %p235 = scmp.eq.s32.totalorder %s26, 0
      %p236 = por %p234, %p235
      %p237 = scmp.ne.s32.totalorder %s225, %s226
      %p238 = scmp.eq.s32.totalorder %s27, 1
      %p239 = por %p237, %p238
      %p241 = scmp.ne.s32.totalorder %s226, %s240
      %p242 = scmp.eq.s32.totalorder %s27, 0
      %p243 = por %p241, %p242
      %s245 = sadd.s32 %s244, 1
      %p248 = scmp.eq.s32.totalorder %s21, 1
      %p249 = scmp.ne.s32.totalorder %s244, %s246
      %p250 = scmp.eq.s32.totalorder %s21, 0
      %p251 = por %p249, %p250
      %p252 = scmp.ne.s32.totalorder %s244, %s246
      %p253 = scmp.eq.s32.totalorder %s26, 1
      %p254 = por %p252, %p253
      %p255 = scmp.ne.s32.totalorder %s246, %s247
      %p256 = scmp.eq.s32.totalorder %s26, 0
      %p257 = por %p255, %p256
      %p258 = scmp.ne.s32.totalorder %s246, %s247
      %p259 = scmp.eq.s32.totalorder %s27, 1
      %p260 = por %p258, %p259
      %p262 = scmp.ne.s32.totalorder %s247, %s261
      %p263 = scmp.eq.s32.totalorder %s27, 0
      %p264 = por %p262, %p263
      %s266 = sadd.s32 %s265, 1
      %p269 = scmp.eq.s32.totalorder %s21, 1
      %p270 = scmp.ne.s32.totalorder %s265, %s267
      %p271 = scmp.eq.s32.totalorder %s21, 0
      %p272 = por %p270, %p271
      %p273 = scmp.ne.s32.totalorder %s265, %s267
      %p274 = scmp.eq.s32.totalorder %s26, 1
      %p275 = por %p273, %p274
      %p276 = scmp.ne.s32.totalorder %s267, %s268
      %p277 = scmp.eq.s32.totalorder %s26, 0
      %p278 = por %p276, %p277
      %p279 = scmp.ne.s32.totalorder %s267, %s268
      %p280 = scmp.eq.s32.totalorder %s27, 1
      %p281 = por %p279, %p280
      %p283 = scmp.ne.s32.totalorder %s268, %s282
      %p284 = scmp.eq.s32.totalorder %s27, 0
      %p285 = por %p283, %p284
      %s286 = ssub.s32 %s21, %s28
      %p287 = scmp.eq.s32.totalorder %s286, 0
      %s289 = sadd.s32 %s288, 1
      %s290 = scalar_select %p287, %s288, %s289
      %p293 = pneg %p287
      %p294 = scmp.eq.s32.totalorder %s21, 1
      %p295 = por %p293, %p294
      %p296 = scmp.ne.s32.totalorder %s288, %s291
      %p297 = scmp.eq.s32.totalorder %s21, 0
      %p298 = por %p296, %p297
      %p299 = scmp.ne.s32.totalorder %s288, %s291
      %p300 = scmp.eq.s32.totalorder %s26, 1
      %p301 = por %p299, %p300
      %p302 = scmp.ne.s32.totalorder %s291, %s292
      %p303 = scmp.eq.s32.totalorder %s26, 0
      %p304 = por %p302, %p303
      %p305 = scmp.ne.s32.totalorder %s291, %s292
      %p306 = scmp.eq.s32.totalorder %s27, 1
      %p307 = por %p305, %p306
      %p309 = scmp.ne.s32.totalorder %s292, %s308
      %p310 = scmp.eq.s32.totalorder %s27, 0
      %p311 = por %p309, %p310
      %p312 = scmp.le.s32.totalorder 1, %s21
      %p313 = scmp.lt.s32.totalorder %s21, 3
      %p314 = pnand %p312, %p313
      %p315 = pneg %p314
      // Predicated region
      $region9: #{tpu_custom_call.1} parent=5 // pred_check
        _
      $region10: #{tpu_custom_call.1} parent=5 // pred_check_branch
        %317 = sbr.rel (%p314) target = $region12
      $region11: #{tpu_custom_call.1} parent=5 // pred_region
        %s318 = ssub.s32 %s21, 1
        // Predicated region
        $region13: #{tpu_custom_call.1} parent=11 // pred_check
          %p319 = pneg %p68
        $region14: #{tpu_custom_call.1} parent=11 // pred_check_branch
          %321 = sbr.rel (%p319) target = $region16
        $region15: #{tpu_custom_call.1} parent=11 // pred_region
          _
        $region16: #{tpu_custom_call.1} parent=11 // pred_fallthru
          _
        // Predicated region
        $region17: #{tpu_custom_call.1} parent=11 // pred_check
          %p322 = pneg %p89
        $region18: #{tpu_custom_call.1} parent=11 // pred_check_branch
          %324 = sbr.rel (%p322) target = $region20
        $region19: #{tpu_custom_call.1} parent=11 // pred_region
          _
        $region20: #{tpu_custom_call.1} parent=11 // pred_fallthru
          _
        // Predicated region
        $region21: #{tpu_custom_call.1} parent=11 // pred_check
          %p325 = pneg %p110
        $region22: #{tpu_custom_call.1} parent=11 // pred_check_branch
          %327 = sbr.rel (%p325) target = $region24
        $region23: #{tpu_custom_call.1} parent=11 // pred_region
          _
        $region24: #{tpu_custom_call.1} parent=11 // pred_fallthru
          _
        // Predicated region
        $region25: #{tpu_custom_call.1} parent=11 // pred_check
          %p328 = pneg %p131
        $region26: #{tpu_custom_call.1} parent=11 // pred_check_branch
          %330 = sbr.rel (%p328) target = $region28
        $region27: #{tpu_custom_call.1} parent=11 // pred_region
          _
        $region28: #{tpu_custom_call.1} parent=11 // pred_fallthru
          _
        // Predicated region
        $region29: #{tpu_custom_call.1} parent=11 // pred_check
          %p331 = pneg %p152
        $region30: #{tpu_custom_call.1} parent=11 // pred_check_branch
          %333 = sbr.rel (%p331) target = $region32
        $region31: #{tpu_custom_call.1} parent=11 // pred_region
          _
        $region32: #{tpu_custom_call.1} parent=11 // pred_fallthru
          _
        // Predicated region
        $region33: #{tpu_custom_call.1} parent=11 // pred_check
          %p334 = pneg %p173
        $region34: #{tpu_custom_call.1} parent=11 // pred_check_branch
          %336 = sbr.rel (%p334) target = $region36
        $region35: #{tpu_custom_call.1} parent=11 // pred_region
          _
        $region36: #{tpu_custom_call.1} parent=11 // pred_fallthru
          _
        // Predicated region
        $region37: #{tpu_custom_call.1} parent=11 // pred_check
          %p337 = pneg %p194
        $region38: #{tpu_custom_call.1} parent=11 // pred_check_branch
          %339 = sbr.rel (%p337) target = $region40
        $region39: #{tpu_custom_call.1} parent=11 // pred_region
          _
        $region40: #{tpu_custom_call.1} parent=11 // pred_fallthru
          _
        // Predicated region
        $region41: #{tpu_custom_call.1} parent=11 // pred_check
          %p340 = pneg %p215
        $region42: #{tpu_custom_call.1} parent=11 // pred_check_branch
          %342 = sbr.rel (%p340) target = $region44
        $region43: #{tpu_custom_call.1} parent=11 // pred_region
          _
        $region44: #{tpu_custom_call.1} parent=11 // pred_fallthru
          _
        // Predicated region
        $region45: #{tpu_custom_call.1} parent=11 // pred_check
          %p343 = pneg %p236
        $region46: #{tpu_custom_call.1} parent=11 // pred_check_branch
          %345 = sbr.rel (%p343) target = $region48
        $region47: #{tpu_custom_call.1} parent=11 // pred_region
          _
        $region48: #{tpu_custom_call.1} parent=11 // pred_fallthru
          _
        // Predicated region
        $region49: #{tpu_custom_call.1} parent=11 // pred_check
          %p346 = pneg %p257
        $region50: #{tpu_custom_call.1} parent=11 // pred_check_branch
          %348 = sbr.rel (%p346) target = $region52
        $region51: #{tpu_custom_call.1} parent=11 // pred_region
          _
        $region52: #{tpu_custom_call.1} parent=11 // pred_fallthru
          _
        // Predicated region
        $region53: #{tpu_custom_call.1} parent=11 // pred_check
          %p349 = pneg %p278
        $region54: #{tpu_custom_call.1} parent=11 // pred_check_branch
          %351 = sbr.rel (%p349) target = $region56
        $region55: #{tpu_custom_call.1} parent=11 // pred_region
          _
        $region56: #{tpu_custom_call.1} parent=11 // pred_fallthru
          _
      $region12: #{tpu_custom_call.1} parent=5 // pred_fallthru
        _
      %p352 = scmp.lt.s32.totalorder %s21, 2
      // Predicated region
      $region57: #{tpu_custom_call.1} parent=5 // pred_check
        %p353 = pneg %p352
      $region58: #{tpu_custom_call.1} parent=5 // pred_check_branch
        %355 = sbr.rel (%p353) target = $region60
      $region59: #{tpu_custom_call.1} parent=5 // pred_region
        // Predicated region
        $region61: #{tpu_custom_call.1} parent=59 // pred_check
          %p356 = pneg %p41
        $region62: #{tpu_custom_call.1} parent=59 // pred_check_branch
          %358 = sbr.rel (%p356) target = $region64
        $region63: #{tpu_custom_call.1} parent=59 // pred_region
          %p359 = scmp.lt.s32.totalorder %s21, 1
          %s360 = scalar_select %p359, %s21, 1
          %s361 = smul.addr %s360, 3
          %s362 = smul.addr %s361, 4
          %s363 = scalar_lea.vmem %s0, %s362
        $region64: #{tpu_custom_call.1} parent=59 // pred_fallthru
          _
      $region60: #{tpu_custom_call.1} parent=5 // pred_fallthru
        _
      %p364 = scmp.le.s32.totalorder 1, %s21
      %p365 = scmp.lt.s32.totalorder %s21, 3
      %p366 = pnand %p364, %p365
      %p367 = pneg %p366
      // Predicated region
      $region65: #{tpu_custom_call.1} parent=5 // pred_check
        _
      $region66: #{tpu_custom_call.1} parent=5 // pred_check_branch
        %369 = sbr.rel (%p366) target = $region68
      $region67: #{tpu_custom_call.1} parent=5 // pred_region
        %s370 = ssub.s32 %s21, 1
        %p371 = scmp.lt.s32.totalorder %s26, 1
        %s372 = scalar_select %p371, %s26, 1
        %s373 = smul.addr %s372, 3
        %s374 = smul.addr %s373, 4
        %s375 = scalar_lea.vmem %s0, %s374
        %p376 = pneg %p47
        %p377 = pneg %p44
        %p378 = pneg %p68
        %p379 = pneg %p65
        %p380 = pneg %p89
        %p381 = pneg %p86
        %p382 = pneg %p110
        %p383 = pneg %p107
        %p384 = pneg %p131
        %p385 = pneg %p128
        %p386 = pneg %p152
        %p387 = pneg %p149
        %p388 = pneg %p173
        %p389 = pneg %p170
        %p390 = pneg %p194
        %p391 = pneg %p191
        %p392 = pneg %p215
        %p393 = pneg %p212
        %p394 = pneg %p236
        %p395 = pneg %p233
        %p396 = pneg %p257
        %p397 = pneg %p254
        %p398 = pneg %p278
        %p399 = pneg %p275
        %p400 = pneg %p304
        %p401 = pneg %p301
        %s402 = sand.u32 %s291, 1
        %s403 = scalar_lea.sflag [#allocation5], %s402
        %s404 = sand.u32 %s291, 1
        %s405 = smul.addr %s404, 12
        %s406 = scalar_lea.vmem [#allocation4], %s405
        %p407 = scmp.lt.s32.totalorder %s26, 1
        %s408 = scalar_select %p407, %s26, 1
        %s409 = smul.addr %s408, 3
        %s410 = smul.addr %s409, 4
        %s411 = scalar_lea.vmem %s0, %s410
        %412 = vst [vmem:[#allocation2] sm:$0xff] 0.0
        %413 = vst [vmem:[#allocation2 + $0x20] sm:$0xff] 0.0
        %414 = vst [vmem:[#allocation3] sm:$0xff] 0.0
        %415 = vst [vmem:[#allocation3 + $0x28] sm:$0xff] 0.0
        %416 = vst [vmem:[#allocation3 + $0x20] sm:$0xff] 0.0
        %417 = vst [vmem:[#allocation3 + $0x48] sm:$0xff] 0.0
        %v418 = vld [vmem:[%s411] sm:$0xff]
        %v419 = vld [vmem:[%s411 + $0x8] sm:$0xf]
        %v420 = vld [vmem:[%s1] sm:$0x7]
        %v421 = vld [vmem:[%s2] sm:$0xff]
        %v422 = vld [vmem:[%s2 + $0x8] sm:$0xff]
        %v423 = vld [vmem:[%s2 + $0x10] sm:$0xff]
        %v424 = vld [vmem:[%s3] sm:$0xff]
        %v425 = vld [vmem:[%s3 + $0x8] sm:$0xff]
        %v426 = vld [vmem:[%s3 + $0x10] sm:$0xff]
        %428 = vset.pattern.permute.xlu0 0
        %429 = vperm.xlu0 %428, %v424
        %v430 = vpop.permute.xlu0 %429
        %433 = vset.pattern.permute.xlu0 0
        %434 = vperm.xlu0 %433, %v425
        %v435 = vpop.permute.xlu0 %434
        %438 = vset.pattern.permute.xlu0 0
        %439 = vperm.xlu0 %438, %v426
        %v440 = vpop.permute.xlu0 %439
        %444 = vst [vmem:[#allocation1] ss:$2 sm:$0xff] %v418
        %s445 = scalar_lea.vmem [#allocation1], 16
        %446 = vst [vmem:[%s445] ss:$2 sm:$0xff] %v419
        %v447 = vld.sshfl [vmem:[#allocation1] sm:$0xff pattern:$0x75316420]
        %v448 = vld.sshfl [vmem:[#allocation1 + $0x8] sm:$0xff pattern:$0x75316420]
        %v449 = vld.sshfl [vmem:[#allocation1 + $0x10] sm:$0xff pattern:$0x75316420]
        %vm450 = vcmask 31744
        %v452 = vsel %vm450, %v421, 0
        %v455 = vsel %vm450, %v422, 0
        %v458 = vsel %vm450, %v423, 0
        %vm460 = vcmask 1043456
        %v461 = vsel %vm460, %v447, 0
        %v463 = vsel %vm460, %v448, 0
        %v465 = vsel %vm460, %v449, 0
        %467 = vmatpush.msra.mxu0 0.0
        %468 = vmatpush.msra.mxu0 0.0
        %469 = vmatpush.msra.mxu0 0.0
        %470 = vmatpush.msra.mxu0 0.0
        %471 = vmatpush.msra.mxu0 0.0
        %472 = vmatpush.msra.mxu0 0.0
        %473 = vmatpush.msra.mxu0 0.0
        %474 = vmatpush.msra.mxu0 0.0
        %475 = vmatpush.msra.mxu0 0.0
        %476 = vmatpush.msra.mxu0 0.0
        %477 = vmatpush.msra.mxu0 0.0
        %478 = vmatpush.msra.mxu0 0.0
        %479 = vmatpush.msra.mxu0 0.0
        %480 = vmatpush.msra.mxu0 0.0
        %481 = vmatpush.msra.mxu0 0.0
        %482 = vmatpush.msra.mxu0 %v461
        %483 = vmatmul.f32.gmra.mxu0 %v452
        %v484 = vpop.f32.mrf.mxu0
        %v485 = vadd.f32 %v430, %v484
        %486 = vmatmul.f32.gmra.mxu0 %v455
        %v487 = vpop.f32.mrf.mxu0
        %v488 = vadd.f32 %v435, %v487
        %489 = vmatmul.f32.gmra.mxu0 %v458
        %v490 = vpop.f32.mrf.mxu0
        %v491 = vadd.f32 %v440, %v490
        %492 = vdwg.mxu0
        %493 = vmatpush.msra.mxu0 0.0
        %494 = vmatpush.msra.mxu0 0.0
        %495 = vmatpush.msra.mxu0 0.0
        %496 = vmatpush.msra.mxu0 0.0
        %497 = vmatpush.msra.mxu0 0.0
        %498 = vmatpush.msra.mxu0 0.0
        %499 = vmatpush.msra.mxu0 0.0
        %500 = vmatpush.msra.mxu0 0.0
        %501 = vmatpush.msra.mxu0 0.0
        %502 = vmatpush.msra.mxu0 0.0
        %503 = vmatpush.msra.mxu0 0.0
        %504 = vmatpush.msra.mxu0 0.0
        %505 = vmatpush.msra.mxu0 0.0
        %506 = vmatpush.msra.mxu0 0.0
        %507 = vmatpush.msra.mxu0 0.0
        %508 = vmatpush.msra.mxu0 %v463
        %509 = vmatmul.f32.gmra.mxu0 %v452
        %v510 = vpop.f32.mrf.mxu0
        %v511 = vadd.f32 %v430, %v510
        %512 = vmatmul.f32.gmra.mxu0 %v455
        %v513 = vpop.f32.mrf.mxu0
        %v514 = vadd.f32 %v435, %v513
        %515 = vmatmul.f32.gmra.mxu0 %v458
        %v516 = vpop.f32.mrf.mxu0
        %v517 = vadd.f32 %v440, %v516
        %518 = vdwg.mxu0
        %519 = vmatpush.msra.mxu0 0.0
        %520 = vmatpush.msra.mxu0 0.0
        %521 = vmatpush.msra.mxu0 0.0
        %522 = vmatpush.msra.mxu0 0.0
        %523 = vmatpush.msra.mxu0 0.0
        %524 = vmatpush.msra.mxu0 0.0
        %525 = vmatpush.msra.mxu0 0.0
        %526 = vmatpush.msra.mxu0 0.0
        %527 = vmatpush.msra.mxu0 0.0
        %528 = vmatpush.msra.mxu0 0.0
        %529 = vmatpush.msra.mxu0 0.0
        %530 = vmatpush.msra.mxu0 0.0
        %531 = vmatpush.msra.mxu0 0.0
        %532 = vmatpush.msra.mxu0 0.0
        %533 = vmatpush.msra.mxu0 0.0
        %534 = vmatpush.msra.mxu0 %v465
        %535 = vmatmul.f32.gmra.mxu0 %v452
        %v536 = vpop.f32.mrf.mxu0
        %v537 = vadd.f32 %v430, %v536
        %538 = vmatmul.f32.gmra.mxu0 %v455
        %v539 = vpop.f32.mrf.mxu0
        %v540 = vadd.f32 %v435, %v539
        %541 = vmatmul.f32.gmra.mxu0 %v458
        %v542 = vpop.f32.mrf.mxu0
        %v543 = vadd.f32 %v440, %v542
        %544 = vdwg.mxu0
        %v545 = vmax.f32 %v485, 0.0
        %v546 = vmax.f32 %v511, 0.0
        %v547 = vmax.f32 %v537, 0.0
        %v548 = vmax.f32 %v488, 0.0
        %v549 = vmax.f32 %v514, 0.0
        %v550 = vmax.f32 %v540, 0.0
        %v551 = vmax.f32 %v491, 0.0
        %v552 = vmax.f32 %v517, 0.0
        %v553 = vmax.f32 %v543, 0.0
        %v555 = vperm.slane %v420, 0
        %v556 = vperm.slane %v420, 1
        %v557 = vperm.slane %v420, 2
        %v561 = vmul.f32 %v545, %v555
        %v562 = vmul.f32 %v546, %v556
        %v563 = vmul.f32 %v547, %v557
        %v564 = vmul.f32 %v548, %v555
        %v565 = vmul.f32 %v549, %v556
        %v566 = vmul.f32 %v550, %v557
        %v567 = vmul.f32 %v551, %v555
        %v568 = vmul.f32 %v552, %v556
        %v569 = vmul.f32 %v553, %v557
        %570 = vst [vmem:[#allocation2 + $0x8] sm:$0xff] %v564
        %571 = vst [vmem:[#allocation2 + $0x10] sm:$0xff] %v565
        %572 = vst [vmem:[#allocation2 + $0x18] sm:$0xff] %v566
        %v573 = vld [vmem:[#allocation2] sm:$0xff]
        %v574 = vld [vmem:[#allocation2 + $0x8] sm:$0xff]
        %v575 = vld [vmem:[#allocation2 + $0x10] sm:$0xff]
        %v576 = vld [vmem:[#allocation2 + $0x18] sm:$0xff]
        %v577 = vld [vmem:[#allocation2 + $0x8] sm:$0xff]
        %v578 = vld [vmem:[#allocation2 + $0x10] sm:$0xff]
        %v579 = vld [vmem:[#allocation2 + $0x18] sm:$0xff]
        %v580 = vld [vmem:[#allocation2 + $0x20] sm:$0xff]
        %585 = vrot.lane.b32.xlu0 %v573, 127
        %v586 = vpop.permute.xlu0 %585
        %587 = vrot.lane.b32.xlu0 %v574, 127
        %v588 = vpop.permute.xlu0 %587
        %589 = vrot.lane.b32.xlu0 %v575, 127
        %v590 = vpop.permute.xlu0 %589
        %591 = vrot.lane.b32.xlu0 %v576, 127
        %v592 = vpop.permute.xlu0 %591
        %vm593 = vcmask 1039360
        %v594 = vsel %vm593, %v586, %v588
        %v595 = vsel %vm593, %v588, %v590
        %v596 = vsel %vm593, %v590, %v592
        %597 = vrot.lane.b32.xlu0 %v573, 126
        %v598 = vpop.permute.xlu0 %597
        %599 = vrot.lane.b32.xlu0 %v574, 126
        %v600 = vpop.permute.xlu0 %599
        %601 = vrot.lane.b32.xlu0 %v575, 126
        %v602 = vpop.permute.xlu0 %601
        %603 = vrot.lane.b32.xlu0 %v576, 126
        %v604 = vpop.permute.xlu0 %603
        %vm605 = vcmask 1031168
        %v606 = vsel %vm605, %v598, %v600
        %v607 = vsel %vm605, %v600, %v602
        %v608 = vsel %vm605, %v602, %v604
        %609 = vrot.lane.b32.xlu0 %v573, 110
        %v610 = vpop.permute.xlu0 %609
        %611 = vrot.lane.b32.xlu0 %v574, 110
        %v612 = vpop.permute.xlu0 %611
        %613 = vrot.lane.b32.xlu0 %v575, 110
        %v614 = vpop.permute.xlu0 %613
        %615 = vrot.lane.b32.xlu0 %v576, 110
        %v616 = vpop.permute.xlu0 %615
        %vm617 = vcmask 900096
        %v618 = vsel %vm617, %v610, %v612
        %v619 = vsel %vm617, %v612, %v614
        %v620 = vsel %vm617, %v614, %v616
        %621 = vrot.lane.b32.xlu0 %v574, 109
        %v622 = vpop.permute.xlu0 %621
        %623 = vrot.lane.b32.xlu0 %v575, 109
        %v624 = vpop.permute.xlu0 %623
        %625 = vrot.lane.b32.xlu0 %v576, 109
        %v626 = vpop.permute.xlu0 %625
        %vm627 = vcmask 891904
        %v628 = vsel %vm627, %v622, %v624
        %v629 = vsel %vm627, %v624, %v626
        %634 = vrot.lane.b32.xlu0 %v577, 108
        %v635 = vpop.permute.xlu0 %634
        %636 = vrot.lane.b32.xlu0 %v578, 108
        %v637 = vpop.permute.xlu0 %636
        %638 = vrot.lane.b32.xlu0 %v579, 108
        %v639 = vpop.permute.xlu0 %638
        %640 = vrot.lane.b32.xlu0 %v580, 108
        %v641 = vpop.permute.xlu0 %640
        %vm642 = vcmask 883712
        %v643 = vsel %vm642, %v635, %v637
        %v644 = vsel %vm642, %v637, %v639
        %v645 = vsel %vm642, %v639, %v641
        %646 = vrot.lane.b32.xlu0 %v577, 92
        %v647 = vpop.permute.xlu0 %646
        %648 = vrot.lane.b32.xlu0 %v578, 92
        %v649 = vpop.permute.xlu0 %648
        %650 = vrot.lane.b32.xlu0 %v579, 92
        %v651 = vpop.permute.xlu0 %650
        %652 = vrot.lane.b32.xlu0 %v580, 92
        %v653 = vpop.permute.xlu0 %652
        %vm654 = vcmask 752640
        %v655 = vsel %vm654, %v647, %v649
        %v656 = vsel %vm654, %v649, %v651
        %v657 = vsel %vm654, %v651, %v653
        %658 = vrot.lane.b32.xlu0 %v577, 91
        %v659 = vpop.permute.xlu0 %658
        %660 = vrot.lane.b32.xlu0 %v578, 91
        %v661 = vpop.permute.xlu0 %660
        %662 = vrot.lane.b32.xlu0 %v579, 91
        %v663 = vpop.permute.xlu0 %662
        %664 = vrot.lane.b32.xlu0 %v580, 91
        %v665 = vpop.permute.xlu0 %664
        %vm666 = vcmask 744448
        %v667 = vsel %vm666, %v659, %v661
        %v668 = vsel %vm666, %v661, %v663
        %v669 = vsel %vm666, %v663, %v665
        %670 = vrot.lane.b32.xlu0 %v577, 90
        %v671 = vpop.permute.xlu0 %670
        %672 = vrot.lane.b32.xlu0 %v578, 90
        %v673 = vpop.permute.xlu0 %672
        %674 = vrot.lane.b32.xlu0 %v579, 90
        %v675 = vpop.permute.xlu0 %674
        %676 = vrot.lane.b32.xlu0 %v580, 90
        %v677 = vpop.permute.xlu0 %676
        %vm678 = vcmask 736256
        %v679 = vsel %vm678, %v671, %v673
        %v680 = vsel %vm678, %v673, %v675
        %v681 = vsel %vm678, %v675, %v677
        %v682 = vld [vmem:[%s4] sm:$0xff]
        %v683 = vld [vmem:[%s5] sm:$0xff]
        %685 = vset.pattern.permute.xlu0 0
        %686 = vperm.xlu0 %685, %v683
        %v687 = vpop.permute.xlu0 %686
        %689 = vrot.lane.b32.xlu0 %v573, 19
        %v690 = vpop.permute.xlu0 %689
        %691 = vrot.lane.b32.xlu0 %v574, 19
        %v692 = vpop.permute.xlu0 %691
        %693 = vrot.lane.b32.xlu0 %v575, 19
        %v694 = vpop.permute.xlu0 %693
        %695 = vrot.lane.b32.xlu0 %v576, 19
        %v696 = vpop.permute.xlu0 %695
        %697 = vrot.lane.b32.xlu0 %v594, 19
        %v698 = vpop.permute.xlu0 %697
        %699 = vrot.lane.b32.xlu0 %v595, 19
        %v700 = vpop.permute.xlu0 %699
        %701 = vrot.lane.b32.xlu0 %v596, 19
        %v702 = vpop.permute.xlu0 %701
        %703 = vrot.lane.b32.xlu0 %v592, 19
        %v704 = vpop.permute.xlu0 %703
        %705 = vrot.lane.b32.xlu0 %v606, 19
        %v706 = vpop.permute.xlu0 %705
        %707 = vrot.lane.b32.xlu0 %v607, 19
        %v708 = vpop.permute.xlu0 %707
        %709 = vrot.lane.b32.xlu0 %v608, 19
        %v710 = vpop.permute.xlu0 %709
        %711 = vrot.lane.b32.xlu0 %v604, 19
        %v712 = vpop.permute.xlu0 %711
        %713 = vrot.lane.b32.xlu0 %v618, 19
        %v714 = vpop.permute.xlu0 %713
        %715 = vrot.lane.b32.xlu0 %v619, 19
        %v716 = vpop.permute.xlu0 %715
        %717 = vrot.lane.b32.xlu0 %v620, 19
        %v718 = vpop.permute.xlu0 %717
        %719 = vrot.lane.b32.xlu0 %v616, 19
        %v720 = vpop.permute.xlu0 %719
        %721 = vrot.lane.b32.xlu0 %v622, 19
        %v722 = vpop.permute.xlu0 %721
        %723 = vrot.lane.b32.xlu0 %v628, 19
        %v724 = vpop.permute.xlu0 %723
        %725 = vrot.lane.b32.xlu0 %v629, 19
        %v726 = vpop.permute.xlu0 %725
        %727 = vrot.lane.b32.xlu0 %v626, 19
        %v728 = vpop.permute.xlu0 %727
        %729 = vrot.lane.b32.xlu0 %v635, 19
        %v730 = vpop.permute.xlu0 %729
        %731 = vrot.lane.b32.xlu0 %v643, 19
        %v732 = vpop.permute.xlu0 %731
        %733 = vrot.lane.b32.xlu0 %v644, 19
        %v734 = vpop.permute.xlu0 %733
        %735 = vrot.lane.b32.xlu0 %v645, 19
        %v736 = vpop.permute.xlu0 %735
        %737 = vrot.lane.b32.xlu0 %v647, 19
        %v738 = vpop.permute.xlu0 %737
        %739 = vrot.lane.b32.xlu0 %v655, 19
        %v740 = vpop.permute.xlu0 %739
        %741 = vrot.lane.b32.xlu0 %v656, 19
        %v742 = vpop.permute.xlu0 %741
        %743 = vrot.lane.b32.xlu0 %v657, 19
        %v744 = vpop.permute.xlu0 %743
        %745 = vrot.lane.b32.xlu0 %v659, 19
        %v746 = vpop.permute.xlu0 %745
        %747 = vrot.lane.b32.xlu0 %v667, 19
        %v748 = vpop.permute.xlu0 %747
        %749 = vrot.lane.b32.xlu0 %v668, 19
        %v750 = vpop.permute.xlu0 %749
        %751 = vrot.lane.b32.xlu0 %v669, 19
        %v752 = vpop.permute.xlu0 %751
        %753 = vrot.lane.b32.xlu0 %v671, 19
        %v754 = vpop.permute.xlu0 %753
        %755 = vrot.lane.b32.xlu0 %v679, 19
        %v756 = vpop.permute.xlu0 %755
        %757 = vrot.lane.b32.xlu0 %v680, 19
        %v758 = vpop.permute.xlu0 %757
        %759 = vrot.lane.b32.xlu0 %v681, 19
        %v760 = vpop.permute.xlu0 %759
        %vm761 = vcmask 154624
        %v762 = vsel %vm761, %v690, %v692
        %v763 = vsel %vm761, %v692, %v694
        %v764 = vsel %vm761, %v694, %v696
        %v765 = vsel %vm761, %v698, %v700
        %v766 = vsel %vm761, %v700, %v702
        %v767 = vsel %vm761, %v702, %v704
        %v768 = vsel %vm761, %v706, %v708
        %v769 = vsel %vm761, %v708, %v710
        %v770 = vsel %vm761, %v710, %v712
        %v771 = vsel %vm761, %v714, %v716
        %v772 = vsel %vm761, %v716, %v718
        %v773 = vsel %vm761, %v718, %v720
        %v774 = vsel %vm761, %v722, %v724
        %v775 = vsel %vm761, %v724, %v726
        %v776 = vsel %vm761, %v726, %v728
        %v777 = vsel %vm761, %v730, %v732
        %v778 = vsel %vm761, %v732, %v734
        %v779 = vsel %vm761, %v734, %v736
        %v780 = vsel %vm761, %v738, %v740
        %v781 = vsel %vm761, %v740, %v742
        %v782 = vsel %vm761, %v742, %v744
        %v783 = vsel %vm761, %v746, %v748
        %v784 = vsel %vm761, %v748, %v750
        %v785 = vsel %vm761, %v750, %v752
        %v786 = vsel %vm761, %v754, %v756
        %v787 = vsel %vm761, %v756, %v758
        %v788 = vsel %vm761, %v758, %v760
        %vm816 = vcmask 588800
        %v818 = vsel %vm816, %v682, 0
        %820 = vmatpush.msra.mxu0 0.0
        %821 = vmatpush.msra.mxu0 0.0
        %822 = vmatpush.msra.mxu0 0.0
        %823 = vmatpush.msra.mxu0 0.0
        %824 = vmatpush.msra.mxu0 0.0
        %825 = vmatpush.msra.mxu0 0.0
        %826 = vmatpush.msra.mxu0 0.0
        %827 = vmatpush.msra.mxu0 %v786
        %828 = vmatpush.msra.mxu0 %v783
        %829 = vmatpush.msra.mxu0 %v780
        %830 = vmatpush.msra.mxu0 %v777
        %831 = vmatpush.msra.mxu0 %v774
        %832 = vmatpush.msra.mxu0 %v771
        %833 = vmatpush.msra.mxu0 %v768
        %834 = vmatpush.msra.mxu0 %v765
        %835 = vmatpush.msra.mxu0 %v762
        %836 = vmatmul.f32.gmra.mxu0 %v818
        %v837 = vpop.f32.mrf.mxu0
        %v838 = vadd.f32 %v687, %v837
        %839 = vdwg.mxu0
        %840 = vmatpush.msra.mxu0 0.0
        %841 = vmatpush.msra.mxu0 0.0
        %842 = vmatpush.msra.mxu0 0.0
        %843 = vmatpush.msra.mxu0 0.0
        %844 = vmatpush.msra.mxu0 0.0
        %845 = vmatpush.msra.mxu0 0.0
        %846 = vmatpush.msra.mxu0 0.0
        %847 = vmatpush.msra.mxu0 %v787
        %848 = vmatpush.msra.mxu0 %v784
        %849 = vmatpush.msra.mxu0 %v781
        %850 = vmatpush.msra.mxu0 %v778
        %851 = vmatpush.msra.mxu0 %v775
        %852 = vmatpush.msra.mxu0 %v772
        %853 = vmatpush.msra.mxu0 %v769
        %854 = vmatpush.msra.mxu0 %v766
        %855 = vmatpush.msra.mxu0 %v763
        %856 = vmatmul.f32.gmra.mxu0 %v818
        %v857 = vpop.f32.mrf.mxu0
        %v858 = vadd.f32 %v687, %v857
        %859 = vdwg.mxu0
        %860 = vmatpush.msra.mxu0 0.0
        %861 = vmatpush.msra.mxu0 0.0
        %862 = vmatpush.msra.mxu0 0.0
        %863 = vmatpush.msra.mxu0 0.0
        %864 = vmatpush.msra.mxu0 0.0
        %865 = vmatpush.msra.mxu0 0.0
        %866 = vmatpush.msra.mxu0 0.0
        %867 = vmatpush.msra.mxu0 %v788
        %868 = vmatpush.msra.mxu0 %v785
        %869 = vmatpush.msra.mxu0 %v782
        %870 = vmatpush.msra.mxu0 %v779
        %871 = vmatpush.msra.mxu0 %v776
        %872 = vmatpush.msra.mxu0 %v773
        %873 = vmatpush.msra.mxu0 %v770
        %874 = vmatpush.msra.mxu0 %v767
        %875 = vmatpush.msra.mxu0 %v764
        %876 = vmatmul.f32.gmra.mxu0 %v818
        %v877 = vpop.f32.mrf.mxu0
        %v878 = vadd.f32 %v687, %v877
        %879 = vdwg.mxu0
        %v880 = vmax.f32 %v838, 0.0
        %v881 = vmax.f32 %v858, 0.0
        %v882 = vmax.f32 %v878, 0.0
        %883 = vst [vmem:[#allocation2 + $0x8] sm:$0xff] %v567
        %884 = vst [vmem:[#allocation2 + $0x10] sm:$0xff] %v568
        %885 = vst [vmem:[#allocation2 + $0x18] sm:$0xff] %v569
        %v886 = vld [vmem:[#allocation2] sm:$0xff]
        %v887 = vld [vmem:[#allocation2 + $0x8] sm:$0xff]
        %v888 = vld [vmem:[#allocation2 + $0x10] sm:$0xff]
        %v889 = vld [vmem:[#allocation2 + $0x18] sm:$0xff]
        %v890 = vld [vmem:[#allocation2 + $0x8] sm:$0xff]
        %v891 = vld [vmem:[#allocation2 + $0x10] sm:$0xff]
        %v892 = vld [vmem:[#allocation2 + $0x18] sm:$0xff]
        %v893 = vld [vmem:[#allocation2 + $0x20] sm:$0xff]
        %898 = vrot.lane.b32.xlu0 %v886, 127
        %v899 = vpop.permute.xlu0 %898
        %900 = vrot.lane.b32.xlu0 %v887, 127
        %v901 = vpop.permute.xlu0 %900
        %902 = vrot.lane.b32.xlu0 %v888, 127
        %v903 = vpop.permute.xlu0 %902
        %904 = vrot.lane.b32.xlu0 %v889, 127
        %v905 = vpop.permute.xlu0 %904
        %v906 = vsel %vm593, %v899, %v901
        %v907 = vsel %vm593, %v901, %v903
        %v908 = vsel %vm593, %v903, %v905
        %909 = vrot.lane.b32.xlu0 %v886, 126
        %v910 = vpop.permute.xlu0 %909
        %911 = vrot.lane.b32.xlu0 %v887, 126
        %v912 = vpop.permute.xlu0 %911
        %913 = vrot.lane.b32.xlu0 %v888, 126
        %v914 = vpop.permute.xlu0 %913
        %915 = vrot.lane.b32.xlu0 %v889, 126
        %v916 = vpop.permute.xlu0 %915
        %v917 = vsel %vm605, %v910, %v912
        %v918 = vsel %vm605, %v912, %v914
        %v919 = vsel %vm605, %v914, %v916
        %920 = vrot.lane.b32.xlu0 %v886, 110
        %v921 = vpop.permute.xlu0 %920
        %922 = vrot.lane.b32.xlu0 %v887, 110
        %v923 = vpop.permute.xlu0 %922
        %924 = vrot.lane.b32.xlu0 %v888, 110
        %v925 = vpop.permute.xlu0 %924
        %926 = vrot.lane.b32.xlu0 %v889, 110
        %v927 = vpop.permute.xlu0 %926
        %v928 = vsel %vm617, %v921, %v923
        %v929 = vsel %vm617, %v923, %v925
        %v930 = vsel %vm617, %v925, %v927
        %931 = vrot.lane.b32.xlu0 %v887, 109
        %v932 = vpop.permute.xlu0 %931
        %933 = vrot.lane.b32.xlu0 %v888, 109
        %v934 = vpop.permute.xlu0 %933
        %935 = vrot.lane.b32.xlu0 %v889, 109
        %v936 = vpop.permute.xlu0 %935
        %v937 = vsel %vm627, %v932, %v934
        %v938 = vsel %vm627, %v934, %v936
        %943 = vrot.lane.b32.xlu0 %v890, 108
        %v944 = vpop.permute.xlu0 %943
        %945 = vrot.lane.b32.xlu0 %v891, 108
        %v946 = vpop.permute.xlu0 %945
        %947 = vrot.lane.b32.xlu0 %v892, 108
        %v948 = vpop.permute.xlu0 %947
        %949 = vrot.lane.b32.xlu0 %v893, 108
        %v950 = vpop.permute.xlu0 %949
        %v951 = vsel %vm642, %v944, %v946
        %v952 = vsel %vm642, %v946, %v948
        %v953 = vsel %vm642, %v948, %v950
        %954 = vrot.lane.b32.xlu0 %v890, 92
        %v955 = vpop.permute.xlu0 %954
        %956 = vrot.lane.b32.xlu0 %v891, 92
        %v957 = vpop.permute.xlu0 %956
        %958 = vrot.lane.b32.xlu0 %v892, 92
        %v959 = vpop.permute.xlu0 %958
        %960 = vrot.lane.b32.xlu0 %v893, 92
        %v961 = vpop.permute.xlu0 %960
        %v962 = vsel %vm654, %v955, %v957
        %v963 = vsel %vm654, %v957, %v959
        %v964 = vsel %vm654, %v959, %v961
        %965 = vrot.lane.b32.xlu0 %v890, 91
        %v966 = vpop.permute.xlu0 %965
        %967 = vrot.lane.b32.xlu0 %v891, 91
        %v968 = vpop.permute.xlu0 %967
        %969 = vrot.lane.b32.xlu0 %v892, 91
        %v970 = vpop.permute.xlu0 %969
        %971 = vrot.lane.b32.xlu0 %v893, 91
        %v972 = vpop.permute.xlu0 %971
        %v973 = vsel %vm666, %v966, %v968
        %v974 = vsel %vm666, %v968, %v970
        %v975 = vsel %vm666, %v970, %v972
        %976 = vrot.lane.b32.xlu0 %v890, 90
        %v977 = vpop.permute.xlu0 %976
        %978 = vrot.lane.b32.xlu0 %v891, 90
        %v979 = vpop.permute.xlu0 %978
        %980 = vrot.lane.b32.xlu0 %v892, 90
        %v981 = vpop.permute.xlu0 %980
        %982 = vrot.lane.b32.xlu0 %v893, 90
        %v983 = vpop.permute.xlu0 %982
        %v984 = vsel %vm678, %v977, %v979
        %v985 = vsel %vm678, %v979, %v981
        %v986 = vsel %vm678, %v981, %v983
        %v987 = vld [vmem:[%s6] sm:$0xff]
        %v988 = vld [vmem:[%s6 + $0x8] sm:$0xff]
        %v989 = vld [vmem:[%s7] sm:$0xff]
        %v990 = vld [vmem:[%s7 + $0x8] sm:$0xff]
        %992 = vset.pattern.permute.xlu0 0
        %993 = vperm.xlu0 %992, %v989
        %v994 = vpop.permute.xlu0 %993
        %997 = vset.pattern.permute.xlu0 0
        %998 = vperm.xlu0 %997, %v990
        %v999 = vpop.permute.xlu0 %998
        %1001 = vrot.lane.b32.xlu0 %v886, 19
        %v1002 = vpop.permute.xlu0 %1001
        %1003 = vrot.lane.b32.xlu0 %v887, 19
        %v1004 = vpop.permute.xlu0 %1003
        %1005 = vrot.lane.b32.xlu0 %v888, 19
        %v1006 = vpop.permute.xlu0 %1005
        %1007 = vrot.lane.b32.xlu0 %v889, 19
        %v1008 = vpop.permute.xlu0 %1007
        %1009 = vrot.lane.b32.xlu0 %v906, 19
        %v1010 = vpop.permute.xlu0 %1009
        %1011 = vrot.lane.b32.xlu0 %v907, 19
        %v1012 = vpop.permute.xlu0 %1011
        %1013 = vrot.lane.b32.xlu0 %v908, 19
        %v1014 = vpop.permute.xlu0 %1013
        %1015 = vrot.lane.b32.xlu0 %v905, 19
        %v1016 = vpop.permute.xlu0 %1015
        %1017 = vrot.lane.b32.xlu0 %v917, 19
        %v1018 = vpop.permute.xlu0 %1017
        %1019 = vrot.lane.b32.xlu0 %v918, 19
        %v1020 = vpop.permute.xlu0 %1019
        %1021 = vrot.lane.b32.xlu0 %v919, 19
        %v1022 = vpop.permute.xlu0 %1021
        %1023 = vrot.lane.b32.xlu0 %v916, 19
        %v1024 = vpop.permute.xlu0 %1023
        %1025 = vrot.lane.b32.xlu0 %v928, 19
        %v1026 = vpop.permute.xlu0 %1025
        %1027 = vrot.lane.b32.xlu0 %v929, 19
        %v1028 = vpop.permute.xlu0 %1027
        %1029 = vrot.lane.b32.xlu0 %v930, 19
        %v1030 = vpop.permute.xlu0 %1029
        %1031 = vrot.lane.b32.xlu0 %v927, 19
        %v1032 = vpop.permute.xlu0 %1031
        %1033 = vrot.lane.b32.xlu0 %v932, 19
        %v1034 = vpop.permute.xlu0 %1033
        %1035 = vrot.lane.b32.xlu0 %v937, 19
        %v1036 = vpop.permute.xlu0 %1035
        %1037 = vrot.lane.b32.xlu0 %v938, 19
        %v1038 = vpop.permute.xlu0 %1037
        %1039 = vrot.lane.b32.xlu0 %v936, 19
        %v1040 = vpop.permute.xlu0 %1039
        %1041 = vrot.lane.b32.xlu0 %v944, 19
        %v1042 = vpop.permute.xlu0 %1041
        %1043 = vrot.lane.b32.xlu0 %v951, 19
        %v1044 = vpop.permute.xlu0 %1043
        %1045 = vrot.lane.b32.xlu0 %v952, 19
        %v1046 = vpop.permute.xlu0 %1045
        %1047 = vrot.lane.b32.xlu0 %v953, 19
        %v1048 = vpop.permute.xlu0 %1047
        %1049 = vrot.lane.b32.xlu0 %v955, 19
        %v1050 = vpop.permute.xlu0 %1049
        %1051 = vrot.lane.b32.xlu0 %v962, 19
        %v1052 = vpop.permute.xlu0 %1051
        %1053 = vrot.lane.b32.xlu0 %v963, 19
        %v1054 = vpop.permute.xlu0 %1053
        %1055 = vrot.lane.b32.xlu0 %v964, 19
        %v1056 = vpop.permute.xlu0 %1055
        %1057 = vrot.lane.b32.xlu0 %v966, 19
        %v1058 = vpop.permute.xlu0 %1057
        %1059 = vrot.lane.b32.xlu0 %v973, 19
        %v1060 = vpop.permute.xlu0 %1059
        %1061 = vrot.lane.b32.xlu0 %v974, 19
        %v1062 = vpop.permute.xlu0 %1061
        %1063 = vrot.lane.b32.xlu0 %v975, 19
        %v1064 = vpop.permute.xlu0 %1063
        %1065 = vrot.lane.b32.xlu0 %v977, 19
        %v1066 = vpop.permute.xlu0 %1065
        %1067 = vrot.lane.b32.xlu0 %v984, 19
        %v1068 = vpop.permute.xlu0 %1067
        %1069 = vrot.lane.b32.xlu0 %v985, 19
        %v1070 = vpop.permute.xlu0 %1069
        %1071 = vrot.lane.b32.xlu0 %v986, 19
        %v1072 = vpop.permute.xlu0 %1071
        %v1073 = vsel %vm761, %v1002, %v1004
        %v1074 = vsel %vm761, %v1004, %v1006
        %v1075 = vsel %vm761, %v1006, %v1008
        %v1076 = vsel %vm761, %v1010, %v1012
        %v1077 = vsel %vm761, %v1012, %v1014
        %v1078 = vsel %vm761, %v1014, %v1016
        %v1079 = vsel %vm761, %v1018, %v1020
        %v1080 = vsel %vm761, %v1020, %v1022
        %v1081 = vsel %vm761, %v1022, %v1024
        %v1082 = vsel %vm761, %v1026, %v1028
        %v1083 = vsel %vm761, %v1028, %v1030
        %v1084 = vsel %vm761, %v1030, %v1032
        %v1085 = vsel %vm761, %v1034, %v1036
        %v1086 = vsel %vm761, %v1036, %v1038
        %v1087 = vsel %vm761, %v1038, %v1040
        %v1088 = vsel %vm761, %v1042, %v1044
        %v1089 = vsel %vm761, %v1044, %v1046
        %v1090 = vsel %vm761, %v1046, %v1048
        %v1091 = vsel %vm761, %v1050, %v1052
        %v1092 = vsel %vm761, %v1052, %v1054
        %v1093 = vsel %vm761, %v1054, %v1056
        %v1094 = vsel %vm761, %v1058, %v1060
        %v1095 = vsel %vm761, %v1060, %v1062
        %v1096 = vsel %vm761, %v1062, %v1064
        %v1097 = vsel %vm761, %v1066, %v1068
        %v1098 = vsel %vm761, %v1068, %v1070
        %v1099 = vsel %vm761, %v1070, %v1072
        %v1128 = vsel %vm816, %v987, 0
        %v1131 = vsel %vm816, %v988, 0
        %1133 = vmatpush.msra.mxu0 0.0
        %1134 = vmatpush.msra.mxu0 0.0
        %1135 = vmatpush.msra.mxu0 0.0
        %1136 = vmatpush.msra.mxu0 0.0
        %1137 = vmatpush.msra.mxu0 0.0
        %1138 = vmatpush.msra.mxu0 0.0
        %1139 = vmatpush.msra.mxu0 0.0
        %1140 = vmatpush.msra.mxu0 %v1097
        %1141 = vmatpush.msra.mxu0 %v1094
        %1142 = vmatpush.msra.mxu0 %v1091
        %1143 = vmatpush.msra.mxu0 %v1088
        %1144 = vmatpush.msra.mxu0 %v1085
        %1145 = vmatpush.msra.mxu0 %v1082
        %1146 = vmatpush.msra.mxu0 %v1079
        %1147 = vmatpush.msra.mxu0 %v1076
        %1148 = vmatpush.msra.mxu0 %v1073
        %1149 = vmatmul.f32.gmra.mxu0 %v1128
        %v1150 = vpop.f32.mrf.mxu0
        %v1151 = vadd.f32 %v994, %v1150
        %1152 = vmatmul.f32.gmra.mxu0 %v1131
        %v1153 = vpop.f32.mrf.mxu0
        %v1154 = vadd.f32 %v999, %v1153
        %1155 = vdwg.mxu0
        %1156 = vmatpush.msra.mxu0 0.0
        %1157 = vmatpush.msra.mxu0 0.0
        %1158 = vmatpush.msra.mxu0 0.0
        %1159 = vmatpush.msra.mxu0 0.0
        %1160 = vmatpush.msra.mxu0 0.0
        %1161 = vmatpush.msra.mxu0 0.0
        %1162 = vmatpush.msra.mxu0 0.0
        %1163 = vmatpush.msra.mxu0 %v1098
        %1164 = vmatpush.msra.mxu0 %v1095
        %1165 = vmatpush.msra.mxu0 %v1092
        %1166 = vmatpush.msra.mxu0 %v1089
        %1167 = vmatpush.msra.mxu0 %v1086
        %1168 = vmatpush.msra.mxu0 %v1083
        %1169 = vmatpush.msra.mxu0 %v1080
        %1170 = vmatpush.msra.mxu0 %v1077
        %1171 = vmatpush.msra.mxu0 %v1074
        %1172 = vmatmul.f32.gmra.mxu0 %v1128
        %v1173 = vpop.f32.mrf.mxu0
        %v1174 = vadd.f32 %v994, %v1173
        %1175 = vmatmul.f32.gmra.mxu0 %v1131
        %v1176 = vpop.f32.mrf.mxu0
        %v1177 = vadd.f32 %v999, %v1176
        %1178 = vdwg.mxu0
        %1179 = vmatpush.msra.mxu0 0.0
        %1180 = vmatpush.msra.mxu0 0.0
        %1181 = vmatpush.msra.mxu0 0.0
        %1182 = vmatpush.msra.mxu0 0.0
        %1183 = vmatpush.msra.mxu0 0.0
        %1184 = vmatpush.msra.mxu0 0.0
        %1185 = vmatpush.msra.mxu0 0.0
        %1186 = vmatpush.msra.mxu0 %v1099
        %1187 = vmatpush.msra.mxu0 %v1096
        %1188 = vmatpush.msra.mxu0 %v1093
        %1189 = vmatpush.msra.mxu0 %v1090
        %1190 = vmatpush.msra.mxu0 %v1087
        %1191 = vmatpush.msra.mxu0 %v1084
        %1192 = vmatpush.msra.mxu0 %v1081
        %1193 = vmatpush.msra.mxu0 %v1078
        %1194 = vmatpush.msra.mxu0 %v1075
        %1195 = vmatmul.f32.gmra.mxu0 %v1128
        %v1196 = vpop.f32.mrf.mxu0
        %v1197 = vadd.f32 %v994, %v1196
        %1198 = vmatmul.f32.gmra.mxu0 %v1131
        %v1199 = vpop.f32.mrf.mxu0
        %v1200 = vadd.f32 %v999, %v1199
        %1201 = vdwg.mxu0
        %v1202 = vmax.f32 %v1151, 0.0
        %v1203 = vmax.f32 %v1174, 0.0
        %v1204 = vmax.f32 %v1197, 0.0
        %v1205 = vmax.f32 %v1154, 0.0
        %v1206 = vmax.f32 %v1177, 0.0
        %v1207 = vmax.f32 %v1200, 0.0
        %v1208 = vmul.f32 %v1202, %v555
        %v1209 = vmul.f32 %v1203, %v556
        %v1210 = vmul.f32 %v1204, %v557
        %v1211 = vmul.f32 %v1205, %v555
        %v1212 = vmul.f32 %v1206, %v556
        %v1213 = vmul.f32 %v1207, %v557
        %1214 = vst [vmem:[#allocation3 + $0x8] sm:$0xff] %v1208
        %1215 = vst [vmem:[#allocation3 + $0x10] sm:$0xff] %v1209
        %1216 = vst [vmem:[#allocation3 + $0x18] sm:$0xff] %v1210
        %1217 = vst [vmem:[#allocation3 + $0x30] sm:$0xff] %v1211
        %1218 = vst [vmem:[#allocation3 + $0x38] sm:$0xff] %v1212
        %1219 = vst [vmem:[#allocation3 + $0x40] sm:$0xff] %v1213
        %v1220 = vld [vmem:[#allocation3] sm:$0xff]
        %v1221 = vld [vmem:[#allocation3 + $0x8] sm:$0xff]
        %v1222 = vld [vmem:[#allocation3 + $0x10] sm:$0xff]
        %v1223 = vld [vmem:[#allocation3 + $0x18] sm:$0xff]
        %v1224 = vld [vmem:[#allocation3 + $0x28] sm:$0xff]
        %v1225 = vld [vmem:[#allocation3 + $0x30] sm:$0xff]
        %v1226 = vld [vmem:[#allocation3 + $0x38] sm:$0xff]
        %v1227 = vld [vmem:[#allocation3 + $0x40] sm:$0xff]
        %v1228 = vld [vmem:[#allocation3 + $0x8] sm:$0xff]
        %v1229 = vld [vmem:[#allocation3 + $0x10] sm:$0xff]
        %v1230 = vld [vmem:[#allocation3 + $0x18] sm:$0xff]
        %v1231 = vld [vmem:[#allocation3 + $0x20] sm:$0xff]
        %v1232 = vld [vmem:[#allocation3 + $0x30] sm:$0xff]
        %v1233 = vld [vmem:[#allocation3 + $0x38] sm:$0xff]
        %v1234 = vld [vmem:[#allocation3 + $0x40] sm:$0xff]
        %v1235 = vld [vmem:[#allocation3 + $0x48] sm:$0xff]
        %1244 = vrot.lane.b32.xlu0 %v1220, 127
        %v1245 = vpop.permute.xlu0 %1244
        %1246 = vrot.lane.b32.xlu0 %v1221, 127
        %v1247 = vpop.permute.xlu0 %1246
        %1248 = vrot.lane.b32.xlu0 %v1222, 127
        %v1249 = vpop.permute.xlu0 %1248
        %1250 = vrot.lane.b32.xlu0 %v1223, 127
        %v1251 = vpop.permute.xlu0 %1250
        %1252 = vrot.lane.b32.xlu0 %v1224, 127
        %v1253 = vpop.permute.xlu0 %1252
        %1254 = vrot.lane.b32.xlu0 %v1225, 127
        %v1255 = vpop.permute.xlu0 %1254
        %1256 = vrot.lane.b32.xlu0 %v1226, 127
        %v1257 = vpop.permute.xlu0 %1256
        %1258 = vrot.lane.b32.xlu0 %v1227, 127
        %v1259 = vpop.permute.xlu0 %1258
        %v1260 = vsel %vm593, %v1245, %v1247
        %v1261 = vsel %vm593, %v1247, %v1249
        %v1262 = vsel %vm593, %v1249, %v1251
        %v1263 = vsel %vm593, %v1253, %v1255
        %v1264 = vsel %vm593, %v1255, %v1257
        %v1265 = vsel %vm593, %v1257, %v1259
        %1266 = vrot.lane.b32.xlu0 %v1220, 126
        %v1267 = vpop.permute.xlu0 %1266
        %1268 = vrot.lane.b32.xlu0 %v1221, 126
        %v1269 = vpop.permute.xlu0 %1268
        %1270 = vrot.lane.b32.xlu0 %v1222, 126
        %v1271 = vpop.permute.xlu0 %1270
        %1272 = vrot.lane.b32.xlu0 %v1223, 126
        %v1273 = vpop.permute.xlu0 %1272
        %1274 = vrot.lane.b32.xlu0 %v1224, 126
        %v1275 = vpop.permute.xlu0 %1274
        %1276 = vrot.lane.b32.xlu0 %v1225, 126
        %v1277 = vpop.permute.xlu0 %1276
        %1278 = vrot.lane.b32.xlu0 %v1226, 126
        %v1279 = vpop.permute.xlu0 %1278
        %1280 = vrot.lane.b32.xlu0 %v1227, 126
        %v1281 = vpop.permute.xlu0 %1280
        %v1282 = vsel %vm605, %v1267, %v1269
        %v1283 = vsel %vm605, %v1269, %v1271
        %v1284 = vsel %vm605, %v1271, %v1273
        %v1285 = vsel %vm605, %v1275, %v1277
        %v1286 = vsel %vm605, %v1277, %v1279
        %v1287 = vsel %vm605, %v1279, %v1281
        %1288 = vrot.lane.b32.xlu0 %v1220, 110
        %v1289 = vpop.permute.xlu0 %1288
        %1290 = vrot.lane.b32.xlu0 %v1221, 110
        %v1291 = vpop.permute.xlu0 %1290
        %1292 = vrot.lane.b32.xlu0 %v1222, 110
        %v1293 = vpop.permute.xlu0 %1292
        %1294 = vrot.lane.b32.xlu0 %v1223, 110
        %v1295 = vpop.permute.xlu0 %1294
        %1296 = vrot.lane.b32.xlu0 %v1224, 110
        %v1297 = vpop.permute.xlu0 %1296
        %1298 = vrot.lane.b32.xlu0 %v1225, 110
        %v1299 = vpop.permute.xlu0 %1298
        %1300 = vrot.lane.b32.xlu0 %v1226, 110
        %v1301 = vpop.permute.xlu0 %1300
        %1302 = vrot.lane.b32.xlu0 %v1227, 110
        %v1303 = vpop.permute.xlu0 %1302
        %v1304 = vsel %vm617, %v1289, %v1291
        %v1305 = vsel %vm617, %v1291, %v1293
        %v1306 = vsel %vm617, %v1293, %v1295
        %v1307 = vsel %vm617, %v1297, %v1299
        %v1308 = vsel %vm617, %v1299, %v1301
        %v1309 = vsel %vm617, %v1301, %v1303
        %1310 = vrot.lane.b32.xlu0 %v1221, 109
        %v1311 = vpop.permute.xlu0 %1310
        %1312 = vrot.lane.b32.xlu0 %v1222, 109
        %v1313 = vpop.permute.xlu0 %1312
        %1314 = vrot.lane.b32.xlu0 %v1223, 109
        %v1315 = vpop.permute.xlu0 %1314
        %1316 = vrot.lane.b32.xlu0 %v1225, 109
        %v1317 = vpop.permute.xlu0 %1316
        %1318 = vrot.lane.b32.xlu0 %v1226, 109
        %v1319 = vpop.permute.xlu0 %1318
        %1320 = vrot.lane.b32.xlu0 %v1227, 109
        %v1321 = vpop.permute.xlu0 %1320
        %v1322 = vsel %vm627, %v1311, %v1313
        %v1323 = vsel %vm627, %v1313, %v1315
        %v1324 = vsel %vm627, %v1317, %v1319
        %v1325 = vsel %vm627, %v1319, %v1321
        %1334 = vrot.lane.b32.xlu0 %v1228, 108
        %v1335 = vpop.permute.xlu0 %1334
        %1336 = vrot.lane.b32.xlu0 %v1229, 108
        %v1337 = vpop.permute.xlu0 %1336
        %1338 = vrot.lane.b32.xlu0 %v1230, 108
        %v1339 = vpop.permute.xlu0 %1338
        %1340 = vrot.lane.b32.xlu0 %v1231, 108
        %v1341 = vpop.permute.xlu0 %1340
        %1342 = vrot.lane.b32.xlu0 %v1232, 108
        %v1343 = vpop.permute.xlu0 %1342
        %1344 = vrot.lane.b32.xlu0 %v1233, 108
        %v1345 = vpop.permute.xlu0 %1344
        %1346 = vrot.lane.b32.xlu0 %v1234, 108
        %v1347 = vpop.permute.xlu0 %1346
        %1348 = vrot.lane.b32.xlu0 %v1235, 108
        %v1349 = vpop.permute.xlu0 %1348
        %v1350 = vsel %vm642, %v1335, %v1337
        %v1351 = vsel %vm642, %v1337, %v1339
        %v1352 = vsel %vm642, %v1339, %v1341
        %v1353 = vsel %vm642, %v1343, %v1345
        %v1354 = vsel %vm642, %v1345, %v1347
        %v1355 = vsel %vm642, %v1347, %v1349
        %1356 = vrot.lane.b32.xlu0 %v1228, 92
        %v1357 = vpop.permute.xlu0 %1356
        %1358 = vrot.lane.b32.xlu0 %v1229, 92
        %v1359 = vpop.permute.xlu0 %1358
        %1360 = vrot.lane.b32.xlu0 %v1230, 92
        %v1361 = vpop.permute.xlu0 %1360
        %1362 = vrot.lane.b32.xlu0 %v1231, 92
        %v1363 = vpop.permute.xlu0 %1362
        %1364 = vrot.lane.b32.xlu0 %v1232, 92
        %v1365 = vpop.permute.xlu0 %1364
        %1366 = vrot.lane.b32.xlu0 %v1233, 92
        %v1367 = vpop.permute.xlu0 %1366
        %1368 = vrot.lane.b32.xlu0 %v1234, 92
        %v1369 = vpop.permute.xlu0 %1368
        %1370 = vrot.lane.b32.xlu0 %v1235, 92
        %v1371 = vpop.permute.xlu0 %1370
        %v1372 = vsel %vm654, %v1357, %v1359
        %v1373 = vsel %vm654, %v1359, %v1361
        %v1374 = vsel %vm654, %v1361, %v1363
        %v1375 = vsel %vm654, %v1365, %v1367
        %v1376 = vsel %vm654, %v1367, %v1369
        %v1377 = vsel %vm654, %v1369, %v1371
        %1378 = vrot.lane.b32.xlu0 %v1228, 91
        %v1379 = vpop.permute.xlu0 %1378
        %1380 = vrot.lane.b32.xlu0 %v1229, 91
        %v1381 = vpop.permute.xlu0 %1380
        %1382 = vrot.lane.b32.xlu0 %v1230, 91
        %v1383 = vpop.permute.xlu0 %1382
        %1384 = vrot.lane.b32.xlu0 %v1231, 91
        %v1385 = vpop.permute.xlu0 %1384
        %1386 = vrot.lane.b32.xlu0 %v1232, 91
        %v1387 = vpop.permute.xlu0 %1386
        %1388 = vrot.lane.b32.xlu0 %v1233, 91
        %v1389 = vpop.permute.xlu0 %1388
        %1390 = vrot.lane.b32.xlu0 %v1234, 91
        %v1391 = vpop.permute.xlu0 %1390
        %1392 = vrot.lane.b32.xlu0 %v1235, 91
        %v1393 = vpop.permute.xlu0 %1392
        %v1394 = vsel %vm666, %v1379, %v1381
        %v1395 = vsel %vm666, %v1381, %v1383
        %v1396 = vsel %vm666, %v1383, %v1385
        %v1397 = vsel %vm666, %v1387, %v1389
        %v1398 = vsel %vm666, %v1389, %v1391
        %v1399 = vsel %vm666, %v1391, %v1393
        %1400 = vrot.lane.b32.xlu0 %v1228, 90
        %v1401 = vpop.permute.xlu0 %1400
        %1402 = vrot.lane.b32.xlu0 %v1229, 90
        %v1403 = vpop.permute.xlu0 %1402
        %1404 = vrot.lane.b32.xlu0 %v1230, 90
        %v1405 = vpop.permute.xlu0 %1404
        %1406 = vrot.lane.b32.xlu0 %v1231, 90
        %v1407 = vpop.permute.xlu0 %1406
        %1408 = vrot.lane.b32.xlu0 %v1232, 90
        %v1409 = vpop.permute.xlu0 %1408
        %1410 = vrot.lane.b32.xlu0 %v1233, 90
        %v1411 = vpop.permute.xlu0 %1410
        %1412 = vrot.lane.b32.xlu0 %v1234, 90
        %v1413 = vpop.permute.xlu0 %1412
        %1414 = vrot.lane.b32.xlu0 %v1235, 90
        %v1415 = vpop.permute.xlu0 %1414
        %v1416 = vsel %vm678, %v1401, %v1403
        %v1417 = vsel %vm678, %v1403, %v1405
        %v1418 = vsel %vm678, %v1405, %v1407
        %v1419 = vsel %vm678, %v1409, %v1411
        %v1420 = vsel %vm678, %v1411, %v1413
        %v1421 = vsel %vm678, %v1413, %v1415
        %v1422 = vld [vmem:[%s8] sm:$0xff]
        %v1423 = vld [vmem:[%s8 + $0x8] sm:$0xff]
        %v1424 = vld [vmem:[%s8 + $0x10] sm:$0xff]
        %v1425 = vld [vmem:[%s8 + $0x18] sm:$0xff]
        %v1426 = vld [vmem:[%s9] sm:$0xff]
        %v1427 = vld [vmem:[%s9 + $0x8] sm:$0xff]
        %1429 = vset.pattern.permute.xlu0 0
        %1430 = vperm.xlu0 %1429, %v1426
        %v1431 = vpop.permute.xlu0 %1430
        %1434 = vset.pattern.permute.xlu0 0
        %1435 = vperm.xlu0 %1434, %v1427
        %v1436 = vpop.permute.xlu0 %1435
        %1438 = vrot.lane.b32.xlu0 %v1220, 19
        %v1439 = vpop.permute.xlu0 %1438
        %1440 = vrot.lane.b32.xlu0 %v1221, 19
        %v1441 = vpop.permute.xlu0 %1440
        %1442 = vrot.lane.b32.xlu0 %v1222, 19
        %v1443 = vpop.permute.xlu0 %1442
        %1444 = vrot.lane.b32.xlu0 %v1223, 19
        %v1445 = vpop.permute.xlu0 %1444
        %1446 = vrot.lane.b32.xlu0 %v1224, 19
        %v1447 = vpop.permute.xlu0 %1446
        %1448 = vrot.lane.b32.xlu0 %v1225, 19
        %v1449 = vpop.permute.xlu0 %1448
        %1450 = vrot.lane.b32.xlu0 %v1226, 19
        %v1451 = vpop.permute.xlu0 %1450
        %1452 = vrot.lane.b32.xlu0 %v1227, 19
        %v1453 = vpop.permute.xlu0 %1452
        %1454 = vrot.lane.b32.xlu0 %v1260, 19
        %v1455 = vpop.permute.xlu0 %1454
        %1456 = vrot.lane.b32.xlu0 %v1261, 19
        %v1457 = vpop.permute.xlu0 %1456
        %1458 = vrot.lane.b32.xlu0 %v1262, 19
        %v1459 = vpop.permute.xlu0 %1458
        %1460 = vrot.lane.b32.xlu0 %v1251, 19
        %v1461 = vpop.permute.xlu0 %1460
        %1462 = vrot.lane.b32.xlu0 %v1263, 19
        %v1463 = vpop.permute.xlu0 %1462
        %1464 = vrot.lane.b32.xlu0 %v1264, 19
        %v1465 = vpop.permute.xlu0 %1464
        %1466 = vrot.lane.b32.xlu0 %v1265, 19
        %v1467 = vpop.permute.xlu0 %1466
        %1468 = vrot.lane.b32.xlu0 %v1259, 19
        %v1469 = vpop.permute.xlu0 %1468
        %1470 = vrot.lane.b32.xlu0 %v1282, 19
        %v1471 = vpop.permute.xlu0 %1470
        %1472 = vrot.lane.b32.xlu0 %v1283, 19
        %v1473 = vpop.permute.xlu0 %1472
        %1474 = vrot.lane.b32.xlu0 %v1284, 19
        %v1475 = vpop.permute.xlu0 %1474
        %1476 = vrot.lane.b32.xlu0 %v1273, 19
        %v1477 = vpop.permute.xlu0 %1476
        %1478 = vrot.lane.b32.xlu0 %v1285, 19
        %v1479 = vpop.permute.xlu0 %1478
        %1480 = vrot.lane.b32.xlu0 %v1286, 19
        %v1481 = vpop.permute.xlu0 %1480
        %1482 = vrot.lane.b32.xlu0 %v1287, 19
        %v1483 = vpop.permute.xlu0 %1482
        %1484 = vrot.lane.b32.xlu0 %v1281, 19
        %v1485 = vpop.permute.xlu0 %1484
        %1486 = vrot.lane.b32.xlu0 %v1304, 19
        %v1487 = vpop.permute.xlu0 %1486
        %1488 = vrot.lane.b32.xlu0 %v1305, 19
        %v1489 = vpop.permute.xlu0 %1488
        %1490 = vrot.lane.b32.xlu0 %v1306, 19
        %v1491 = vpop.permute.xlu0 %1490
        %1492 = vrot.lane.b32.xlu0 %v1295, 19
        %v1493 = vpop.permute.xlu0 %1492
        %1494 = vrot.lane.b32.xlu0 %v1307, 19
        %v1495 = vpop.permute.xlu0 %1494
        %1496 = vrot.lane.b32.xlu0 %v1308, 19
        %v1497 = vpop.permute.xlu0 %1496
        %1498 = vrot.lane.b32.xlu0 %v1309, 19
        %v1499 = vpop.permute.xlu0 %1498
        %1500 = vrot.lane.b32.xlu0 %v1303, 19
        %v1501 = vpop.permute.xlu0 %1500
        %1502 = vrot.lane.b32.xlu0 %v1311, 19
        %v1503 = vpop.permute.xlu0 %1502
        %1504 = vrot.lane.b32.xlu0 %v1322, 19
        %v1505 = vpop.permute.xlu0 %1504
        %1506 = vrot.lane.b32.xlu0 %v1323, 19
        %v1507 = vpop.permute.xlu0 %1506
        %1508 = vrot.lane.b32.xlu0 %v1315, 19
        %v1509 = vpop.permute.xlu0 %1508
        %1510 = vrot.lane.b32.xlu0 %v1317, 19
        %v1511 = vpop.permute.xlu0 %1510
        %1512 = vrot.lane.b32.xlu0 %v1324, 19
        %v1513 = vpop.permute.xlu0 %1512
        %1514 = vrot.lane.b32.xlu0 %v1325, 19
        %v1515 = vpop.permute.xlu0 %1514
        %1516 = vrot.lane.b32.xlu0 %v1321, 19
        %v1517 = vpop.permute.xlu0 %1516
        %1518 = vrot.lane.b32.xlu0 %v1335, 19
        %v1519 = vpop.permute.xlu0 %1518
        %1520 = vrot.lane.b32.xlu0 %v1350, 19
        %v1521 = vpop.permute.xlu0 %1520
        %1522 = vrot.lane.b32.xlu0 %v1351, 19
        %v1523 = vpop.permute.xlu0 %1522
        %1524 = vrot.lane.b32.xlu0 %v1352, 19
        %v1525 = vpop.permute.xlu0 %1524
        %1526 = vrot.lane.b32.xlu0 %v1343, 19
        %v1527 = vpop.permute.xlu0 %1526
        %1528 = vrot.lane.b32.xlu0 %v1353, 19
        %v1529 = vpop.permute.xlu0 %1528
        %1530 = vrot.lane.b32.xlu0 %v1354, 19
        %v1531 = vpop.permute.xlu0 %1530
        %1532 = vrot.lane.b32.xlu0 %v1355, 19
        %v1533 = vpop.permute.xlu0 %1532
        %1534 = vrot.lane.b32.xlu0 %v1357, 19
        %v1535 = vpop.permute.xlu0 %1534
        %1536 = vrot.lane.b32.xlu0 %v1372, 19
        %v1537 = vpop.permute.xlu0 %1536
        %1538 = vrot.lane.b32.xlu0 %v1373, 19
        %v1539 = vpop.permute.xlu0 %1538
        %1540 = vrot.lane.b32.xlu0 %v1374, 19
        %v1541 = vpop.permute.xlu0 %1540
        %1542 = vrot.lane.b32.xlu0 %v1365, 19
        %v1543 = vpop.permute.xlu0 %1542
        %1544 = vrot.lane.b32.xlu0 %v1375, 19
        %v1545 = vpop.permute.xlu0 %1544
        %1546 = vrot.lane.b32.xlu0 %v1376, 19
        %v1547 = vpop.permute.xlu0 %1546
        %1548 = vrot.lane.b32.xlu0 %v1377, 19
        %v1549 = vpop.permute.xlu0 %1548
        %1550 = vrot.lane.b32.xlu0 %v1379, 19
        %v1551 = vpop.permute.xlu0 %1550
        %1552 = vrot.lane.b32.xlu0 %v1394, 19
        %v1553 = vpop.permute.xlu0 %1552
        %1554 = vrot.lane.b32.xlu0 %v1395, 19
        %v1555 = vpop.permute.xlu0 %1554
        %1556 = vrot.lane.b32.xlu0 %v1396, 19
        %v1557 = vpop.permute.xlu0 %1556
        %1558 = vrot.lane.b32.xlu0 %v1387, 19
        %v1559 = vpop.permute.xlu0 %1558
        %1560 = vrot.lane.b32.xlu0 %v1397, 19
        %v1561 = vpop.permute.xlu0 %1560
        %1562 = vrot.lane.b32.xlu0 %v1398, 19
        %v1563 = vpop.permute.xlu0 %1562
        %1564 = vrot.lane.b32.xlu0 %v1399, 19
        %v1565 = vpop.permute.xlu0 %1564
        %1566 = vrot.lane.b32.xlu0 %v1401, 19
        %v1567 = vpop.permute.xlu0 %1566
        %1568 = vrot.lane.b32.xlu0 %v1416, 19
        %v1569 = vpop.permute.xlu0 %1568
        %1570 = vrot.lane.b32.xlu0 %v1417, 19
        %v1571 = vpop.permute.xlu0 %1570
        %1572 = vrot.lane.b32.xlu0 %v1418, 19
        %v1573 = vpop.permute.xlu0 %1572
        %1574 = vrot.lane.b32.xlu0 %v1409, 19
        %v1575 = vpop.permute.xlu0 %1574
        %1576 = vrot.lane.b32.xlu0 %v1419, 19
        %v1577 = vpop.permute.xlu0 %1576
        %1578 = vrot.lane.b32.xlu0 %v1420, 19
        %v1579 = vpop.permute.xlu0 %1578
        %1580 = vrot.lane.b32.xlu0 %v1421, 19
        %v1581 = vpop.permute.xlu0 %1580
        %v1582 = vsel %vm761, %v1439, %v1441
        %v1583 = vsel %vm761, %v1441, %v1443
        %v1584 = vsel %vm761, %v1443, %v1445
        %v1585 = vsel %vm761, %v1447, %v1449
        %v1586 = vsel %vm761, %v1449, %v1451
        %v1587 = vsel %vm761, %v1451, %v1453
        %v1588 = vsel %vm761, %v1455, %v1457
        %v1589 = vsel %vm761, %v1457, %v1459
        %v1590 = vsel %vm761, %v1459, %v1461
        %v1591 = vsel %vm761, %v1463, %v1465
        %v1592 = vsel %vm761, %v1465, %v1467
        %v1593 = vsel %vm761, %v1467, %v1469
        %v1594 = vsel %vm761, %v1471, %v1473
        %v1595 = vsel %vm761, %v1473, %v1475
        %v1596 = vsel %vm761, %v1475, %v1477
        %v1597 = vsel %vm761, %v1479, %v1481
        %v1598 = vsel %vm761, %v1481, %v1483
        %v1599 = vsel %vm761, %v1483, %v1485
        %v1600 = vsel %vm761, %v1487, %v1489
        %v1601 = vsel %vm761, %v1489, %v1491
        %v1602 = vsel %vm761, %v1491, %v1493
        %v1603 = vsel %vm761, %v1495, %v1497
        %v1604 = vsel %vm761, %v1497, %v1499
        %v1605 = vsel %vm761, %v1499, %v1501
        %v1606 = vsel %vm761, %v1503, %v1505
        %v1607 = vsel %vm761, %v1505, %v1507
        %v1608 = vsel %vm761, %v1507, %v1509
        %v1609 = vsel %vm761, %v1511, %v1513
        %v1610 = vsel %vm761, %v1513, %v1515
        %v1611 = vsel %vm761, %v1515, %v1517
        %v1612 = vsel %vm761, %v1519, %v1521
        %v1613 = vsel %vm761, %v1521, %v1523
        %v1614 = vsel %vm761, %v1523, %v1525
        %v1615 = vsel %vm761, %v1527, %v1529
        %v1616 = vsel %vm761, %v1529, %v1531
        %v1617 = vsel %vm761, %v1531, %v1533
        %v1618 = vsel %vm761, %v1535, %v1537
        %v1619 = vsel %vm761, %v1537, %v1539
        %v1620 = vsel %vm761, %v1539, %v1541
        %v1621 = vsel %vm761, %v1543, %v1545
        %v1622 = vsel %vm761, %v1545, %v1547
        %v1623 = vsel %vm761, %v1547, %v1549
        %v1624 = vsel %vm761, %v1551, %v1553
        %v1625 = vsel %vm761, %v1553, %v1555
        %v1626 = vsel %vm761, %v1555, %v1557
        %v1627 = vsel %vm761, %v1559, %v1561
        %v1628 = vsel %vm761, %v1561, %v1563
        %v1629 = vsel %vm761, %v1563, %v1565
        %v1630 = vsel %vm761, %v1567, %v1569
        %v1631 = vsel %vm761, %v1569, %v1571
        %v1632 = vsel %vm761, %v1571, %v1573
        %v1633 = vsel %vm761, %v1575, %v1577
        %v1634 = vsel %vm761, %v1577, %v1579
        %v1635 = vsel %vm761, %v1579, %v1581
        %vm1690 = vcmask 130048
        %v1692 = vsel %vm1690, %v1423, 0
        %v1695 = vsel %vm1690, %v1425, 0
        %1697 = vmatpush.msra.mxu0 %v1627
        %1698 = vmatpush.msra.mxu0 %v1624
        %1699 = vmatpush.msra.mxu0 %v1621
        %1700 = vmatpush.msra.mxu0 %v1618
        %1701 = vmatpush.msra.mxu0 %v1615
        %1702 = vmatpush.msra.mxu0 %v1612
        %1703 = vmatpush.msra.mxu0 %v1609
        %1704 = vmatpush.msra.mxu0 %v1606
        %1705 = vmatpush.msra.mxu0 %v1603
        %1706 = vmatpush.msra.mxu0 %v1600
        %1707 = vmatpush.msra.mxu0 %v1597
        %1708 = vmatpush.msra.mxu0 %v1594
        %1709 = vmatpush.msra.mxu0 %v1591
        %1710 = vmatpush.msra.mxu0 %v1588
        %1711 = vmatpush.msra.mxu0 %v1585
        %1712 = vmatpush.msra.mxu0 %v1582
        %1713 = vmatmul.f32.gmra.mxu0 %v1422
        %v1714 = vpop.f32.mrf.mxu0
        %v1715 = vadd.f32 %v1431, %v1714
        %1716 = vmatmul.f32.gmra.mxu0 %v1424
        %v1717 = vpop.f32.mrf.mxu0
        %v1718 = vadd.f32 %v1436, %v1717
        %1719 = vdwg.mxu0
        %1720 = vmatpush.msra.mxu0 0.0
        %1721 = vmatpush.msra.mxu0 0.0
        %1722 = vmatpush.msra.mxu0 0.0
        %1723 = vmatpush.msra.mxu0 0.0
        %1724 = vmatpush.msra.mxu0 0.0
        %1725 = vmatpush.msra.mxu0 0.0
        %1726 = vmatpush.msra.mxu0 0.0
        %1727 = vmatpush.msra.mxu0 0.0
        %1728 = vmatpush.msra.mxu0 0.0
        %1729 = vmatpush.msra.mxu0 0.0
        %1730 = vmatpush.msra.mxu0 0.0
        %1731 = vmatpush.msra.mxu0 0.0
        %1732 = vmatpush.msra.mxu0 0.0
        %1733 = vmatpush.msra.mxu0 0.0
        %1734 = vmatpush.msra.mxu0 %v1633
        %1735 = vmatpush.msra.mxu0 %v1630
        %1736 = vmatmul.f32.gmra.mxu0 %v1692
        %v1737 = vpop.f32.mrf.mxu0
        %v1738 = vadd.f32 %v1715, %v1737
        %1739 = vmatmul.f32.gmra.mxu0 %v1695
        %v1740 = vpop.f32.mrf.mxu0
        %v1741 = vadd.f32 %v1718, %v1740
        %1742 = vdwg.mxu0
        %1743 = vmatpush.msra.mxu0 %v1628
        %1744 = vmatpush.msra.mxu0 %v1625
        %1745 = vmatpush.msra.mxu0 %v1622
        %1746 = vmatpush.msra.mxu0 %v1619
        %1747 = vmatpush.msra.mxu0 %v1616
        %1748 = vmatpush.msra.mxu0 %v1613
        %1749 = vmatpush.msra.mxu0 %v1610
        %1750 = vmatpush.msra.mxu0 %v1607
        %1751 = vmatpush.msra.mxu0 %v1604
        %1752 = vmatpush.msra.mxu0 %v1601
        %1753 = vmatpush.msra.mxu0 %v1598
        %1754 = vmatpush.msra.mxu0 %v1595
        %1755 = vmatpush.msra.mxu0 %v1592
        %1756 = vmatpush.msra.mxu0 %v1589
        %1757 = vmatpush.msra.mxu0 %v1586
        %1758 = vmatpush.msra.mxu0 %v1583
        %1759 = vmatmul.f32.gmra.mxu0 %v1422
        %v1760 = vpop.f32.mrf.mxu0
        %v1761 = vadd.f32 %v1431, %v1760
        %1762 = vmatmul.f32.gmra.mxu0 %v1424
        %v1763 = vpop.f32.mrf.mxu0
        %v1764 = vadd.f32 %v1436, %v1763
        %1765 = vdwg.mxu0
        %1766 = vmatpush.msra.mxu0 0.0
        %1767 = vmatpush.msra.mxu0 0.0
        %1768 = vmatpush.msra.mxu0 0.0
        %1769 = vmatpush.msra.mxu0 0.0
        %1770 = vmatpush.msra.mxu0 0.0
        %1771 = vmatpush.msra.mxu0 0.0
        %1772 = vmatpush.msra.mxu0 0.0
        %1773 = vmatpush.msra.mxu0 0.0
        %1774 = vmatpush.msra.mxu0 0.0
        %1775 = vmatpush.msra.mxu0 0.0
        %1776 = vmatpush.msra.mxu0 0.0
        %1777 = vmatpush.msra.mxu0 0.0
        %1778 = vmatpush.msra.mxu0 0.0
        %1779 = vmatpush.msra.mxu0 0.0
        %1780 = vmatpush.msra.mxu0 %v1634
        %1781 = vmatpush.msra.mxu0 %v1631
        %1782 = vmatmul.f32.gmra.mxu0 %v1692
        %v1783 = vpop.f32.mrf.mxu0
        %v1784 = vadd.f32 %v1761, %v1783
        %1785 = vmatmul.f32.gmra.mxu0 %v1695
        %v1786 = vpop.f32.mrf.mxu0
        %v1787 = vadd.f32 %v1764, %v1786
        %1788 = vdwg.mxu0
        %1789 = vmatpush.msra.mxu0 %v1629
        %1790 = vmatpush.msra.mxu0 %v1626
        %1791 = vmatpush.msra.mxu0 %v1623
        %1792 = vmatpush.msra.mxu0 %v1620
        %1793 = vmatpush.msra.mxu0 %v1617
        %1794 = vmatpush.msra.mxu0 %v1614
        %1795 = vmatpush.msra.mxu0 %v1611
        %1796 = vmatpush.msra.mxu0 %v1608
        %1797 = vmatpush.msra.mxu0 %v1605
        %1798 = vmatpush.msra.mxu0 %v1602
        %1799 = vmatpush.msra.mxu0 %v1599
        %1800 = vmatpush.msra.mxu0 %v1596
        %1801 = vmatpush.msra.mxu0 %v1593
        %1802 = vmatpush.msra.mxu0 %v1590
        %1803 = vmatpush.msra.mxu0 %v1587
        %1804 = vmatpush.msra.mxu0 %v1584
        %1805 = vmatmul.f32.gmra.mxu0 %v1422
        %v1806 = vpop.f32.mrf.mxu0
        %v1807 = vadd.f32 %v1431, %v1806
        %1808 = vmatmul.f32.gmra.mxu0 %v1424
        %v1809 = vpop.f32.mrf.mxu0
        %v1810 = vadd.f32 %v1436, %v1809
        %1811 = vdwg.mxu0
        %1812 = vmatpush.msra.mxu0 0.0
        %1813 = vmatpush.msra.mxu0 0.0
        %1814 = vmatpush.msra.mxu0 0.0
        %1815 = vmatpush.msra.mxu0 0.0
        %1816 = vmatpush.msra.mxu0 0.0
        %1817 = vmatpush.msra.mxu0 0.0
        %1818 = vmatpush.msra.mxu0 0.0
        %1819 = vmatpush.msra.mxu0 0.0
        %1820 = vmatpush.msra.mxu0 0.0
        %1821 = vmatpush.msra.mxu0 0.0
        %1822 = vmatpush.msra.mxu0 0.0
        %1823 = vmatpush.msra.mxu0 0.0
        %1824 = vmatpush.msra.mxu0 0.0
        %1825 = vmatpush.msra.mxu0 0.0
        %1826 = vmatpush.msra.mxu0 %v1635
        %1827 = vmatpush.msra.mxu0 %v1632
        %1828 = vmatmul.f32.gmra.mxu0 %v1692
        %v1829 = vpop.f32.mrf.mxu0
        %v1830 = vadd.f32 %v1807, %v1829
        %1831 = vmatmul.f32.gmra.mxu0 %v1695
        %v1832 = vpop.f32.mrf.mxu0
        %v1833 = vadd.f32 %v1810, %v1832
        %1834 = vdwg.mxu0
        %v1835 = vmax.f32 %v1738, 0.0
        %v1836 = vmax.f32 %v1784, 0.0
        %v1837 = vmax.f32 %v1830, 0.0
        %v1838 = vmax.f32 %v1741, 0.0
        %v1839 = vmax.f32 %v1787, 0.0
        %v1840 = vmax.f32 %v1833, 0.0
        %v1841 = vld [vmem:[%s10] sm:$0xf]
        %v1842 = vld [vmem:[%s11] sm:$0xf]
        %1844 = vset.pattern.permute.xlu0 0
        %1845 = vperm.xlu0 %1844, %v1842
        %v1846 = vpop.permute.xlu0 %1845
        %vm1848 = vcmask 261120
        %v1850 = vsel %vm1848, %v1841, 0
        %1852 = vmatpush.msra.mxu0 0.0
        %1853 = vmatpush.msra.mxu0 0.0
        %1854 = vmatpush.msra.mxu0 0.0
        %1855 = vmatpush.msra.mxu0 0.0
        %1856 = vmatpush.msra.mxu0 0.0
        %1857 = vmatpush.msra.mxu0 0.0
        %1858 = vmatpush.msra.mxu0 0.0
        %1859 = vmatpush.msra.mxu0 0.0
        %1860 = vmatpush.msra.mxu0 0.0
        %1861 = vmatpush.msra.mxu0 0.0
        %1862 = vmatpush.msra.mxu0 0.0
        %1863 = vmatpush.msra.mxu0 0.0
        %1864 = vmatpush.msra.mxu0 %v1838
        %1865 = vmatpush.msra.mxu0 %v1835
        %1866 = vmatpush.msra.mxu0 %v880
        %1867 = vmatpush.msra.mxu0 %v561
        %1868 = vmatmul.f32.gmra.mxu0 %v1850
        %v1869 = vpop.f32.mrf.mxu0
        %v1870 = vadd.f32 %v1846, %v1869
        %1871 = vdwg.mxu0
        %1872 = vmatpush.msra.mxu0 0.0
        %1873 = vmatpush.msra.mxu0 0.0
        %1874 = vmatpush.msra.mxu0 0.0
        %1875 = vmatpush.msra.mxu0 0.0
        %1876 = vmatpush.msra.mxu0 0.0
        %1877 = vmatpush.msra.mxu0 0.0
        %1878 = vmatpush.msra.mxu0 0.0
        %1879 = vmatpush.msra.mxu0 0.0
        %1880 = vmatpush.msra.mxu0 0.0
        %1881 = vmatpush.msra.mxu0 0.0
        %1882 = vmatpush.msra.mxu0 0.0
        %1883 = vmatpush.msra.mxu0 0.0
        %1884 = vmatpush.msra.mxu0 %v1839
        %1885 = vmatpush.msra.mxu0 %v1836
        %1886 = vmatpush.msra.mxu0 %v881
        %1887 = vmatpush.msra.mxu0 %v562
        %1888 = vmatmul.f32.gmra.mxu0 %v1850
        %v1889 = vpop.f32.mrf.mxu0
        %v1890 = vadd.f32 %v1846, %v1889
        %1891 = vdwg.mxu0
        %1892 = vmatpush.msra.mxu0 0.0
        %1893 = vmatpush.msra.mxu0 0.0
        %1894 = vmatpush.msra.mxu0 0.0
        %1895 = vmatpush.msra.mxu0 0.0
        %1896 = vmatpush.msra.mxu0 0.0
        %1897 = vmatpush.msra.mxu0 0.0
        %1898 = vmatpush.msra.mxu0 0.0
        %1899 = vmatpush.msra.mxu0 0.0
        %1900 = vmatpush.msra.mxu0 0.0
        %1901 = vmatpush.msra.mxu0 0.0
        %1902 = vmatpush.msra.mxu0 0.0
        %1903 = vmatpush.msra.mxu0 0.0
        %1904 = vmatpush.msra.mxu0 %v1840
        %1905 = vmatpush.msra.mxu0 %v1837
        %1906 = vmatpush.msra.mxu0 %v882
        %1907 = vmatpush.msra.mxu0 %v563
        %1908 = vmatmul.f32.gmra.mxu0 %v1850
        %v1909 = vpop.f32.mrf.mxu0
        %v1910 = vadd.f32 %v1846, %v1909
        %1911 = vdwg.mxu0
        %v1912 = vmul.f32 %v1870, 0.5
        %v1913 = vmul.f32 %v1890, 0.5
        %v1914 = vmul.f32 %v1910, 0.5
        %v1917 = vrot.slane %v1913, 4
        %v1918 = vsel %vm460, %v1912, %v1917
        %v1920 = vadd.f32 %v418, %v1918
        %v1921 = vadd.f32 %v419, %v1914
        %v1922 = vmax.f32 %v1920, 0.0
        %v1923 = vmax.f32 %v1921, 0.0
        %1924 = vst [vmem:[%s406] sm:$0xff] %v1922
        %1925 = vst [vmem:[%s406 + $0x8] sm:$0xf] %v1923
        %s1926 = sand.u32 %s291, 1
        %s1927 = scalar_lea.sflag [#allocation5], %s1926
        %s1928 = sand.u32 %s291, 1
        %s1929 = smul.addr %s1928, 12
        %s1930 = scalar_lea.vmem [#allocation4], %s1929
        // Predicated region
        $region69: #{tpu_custom_call.1} parent=67 // pred_check
          %p1931 = pneg %p301
        $region70: #{tpu_custom_call.1} parent=67 // pred_check_branch
          %1933 = sbr.rel (%p1931) target = $region72
        $region71: #{tpu_custom_call.1} parent=67 // pred_region
          %1935 = vsyncadd %s1927, 0
          %s1936 = smul.addr %s26, 3
          %s1937 = smul.addr %s1936, 4
          %s1938 = scalar_lea.hbm %s12, %s1937
          %s1940 = sshll.u32 %s1930, 4
          %s1941 = int_to_ptr.vmem [resolvable:$true] %s1940
          %s1942 = sshll.u32 %s1938, 4
          %s1943 = int_to_ptr.hbm [resolvable:$true] %s1942
          %1945 = dma.vmem_to_hbm [thread:$0]  %s1941, 192, %s1943, %s1927
        $region72: #{tpu_custom_call.1} parent=67 // pred_fallthru
          _
      $region68: #{tpu_custom_call.1} parent=5 // pred_fallthru
        _
      %p1946 = scmp.le.s32.totalorder 2, %s21
      // Predicated region
      $region73: #{tpu_custom_call.1} parent=5 // pred_check
        %p1947 = pneg %p1946
      $region74: #{tpu_custom_call.1} parent=5 // pred_check_branch
        %1949 = sbr.rel (%p1947) target = $region76
      $region75: #{tpu_custom_call.1} parent=5 // pred_region
        %s1950 = ssub.s32 %s21, 2
        // Predicated region
        $region77: #{tpu_custom_call.1} parent=75 // pred_check
          %p1951 = pneg %p307
        $region78: #{tpu_custom_call.1} parent=75 // pred_check_branch
          %1953 = sbr.rel (%p1951) target = $region80
        $region79: #{tpu_custom_call.1} parent=75 // pred_region
          %s1954 = sand.u32 %s292, 1
          %s1955 = scalar_lea.sflag [#allocation5], %s1954
          %s1956 = sand.u32 %s292, 1
          %s1957 = smul.addr %s1956, 12
          %s1958 = scalar_lea.vmem [#allocation4], %s1957
          %1960 = dma.done %s1955, 192
        $region80: #{tpu_custom_call.1} parent=75 // pred_fallthru
          _
      $region76: #{tpu_custom_call.1} parent=5 // pred_fallthru
        _
    $region6: #{tpu_custom_call.1} parent=1 // loop_footer
      %s25 = sadd.s32 1, %s21
    $region7: #{tpu_custom_call.1} parent=1 // loop_footer_branch
      %20 = sbr.rel target = $region3
    $region8: #{tpu_custom_call.1} parent=1 // loop_exit
      _
    %1961 = vsyncpa [#allocation5], 1
    %s1962 = scalar_lea.sflag [#allocation5], 1
    %1963 = vsyncpa %s1962, 1

</llo_original>
